<compile_context>
chip_gen: v5e
topology: v5e:2x2
jax: 0.10.0
libtpu: 0.0.40
codegen_flags: <defaults>
</compile_context>

<pallas_src>
import functools

import jax
import jax.numpy as jnp
from jax import lax
from jax.experimental import pallas as pl
from jax.experimental.pallas import tpu as pltpu


# ----------------------------- fused Pallas kernel ------------------------------

def _fused_bottleneck_kernel(x_ref, wslab_ref, fslab_ref, o_ref, pad_ref, col_ref,
                             *, stride, w_b, w_se, w_out):
    # x_ref    : (1, H, W, Cin) compute dtype (bf16 prod / f32 check)
    # wslab_ref: (Cin + 10*w_b, max(w_b, w_out)) compute dtype, packed matmul weights
    #            rows [0,Cin)=conv-a, [Cin,Cin+9*w_b)=conv-b im2col, rest=conv-c (BN folded)
    # fslab_ref: (5 + w_b + w_se, max(w_b, w_out, w_se)) f32: biases + SE fc weights
    # o_ref    : (1, Ho*Wo, w_out) f32
    # pad_ref  : (H+2, W+2, w_b) f32 scratch (zero-padded conv-a activation)
    # col_ref  : (Ho*Wo, 9*w_b) f32 scratch (im2col patches)
    _, h, w, cin = x_ref.shape
    hp, wp, _ = pad_ref.shape
    ho = (hp - 3) // stride + 1
    wo = (wp - 3) // stride + 1
    cdt = wslab_ref.dtype
    f32 = jnp.float32

    # ---- unpack the two packed operand slabs (all-static slices) ----
    wa = wslab_ref[pl.ds(0, cin), pl.ds(0, w_b)]                       # (Cin, w_b)
    wbm = wslab_ref[pl.ds(cin, 9 * w_b), pl.ds(0, w_b)]                # (9*w_b, w_b)
    wc = wslab_ref[pl.ds(cin + 9 * w_b, w_b), pl.ds(0, w_out)]         # (w_b, w_out)
    ba = fslab_ref[pl.ds(0, 1), pl.ds(0, w_b)]
    bb = fslab_ref[pl.ds(1, 1), pl.ds(0, w_b)]
    bc = fslab_ref[pl.ds(2, 1), pl.ds(0, w_out)]
    b1 = fslab_ref[pl.ds(3, 1), pl.ds(0, w_se)]
    b2 = fslab_ref[pl.ds(4, 1), pl.ds(0, w_b)]
    w1 = fslab_ref[pl.ds(5, w_b), pl.ds(0, w_se)]                      # (w_b, w_se) f32
    w2 = fslab_ref[pl.ds(5 + w_b, w_se), pl.ds(0, w_b)]                # (w_se, w_b) f32

    # ---- zero ONLY the 1-wide border of the padded scratch (interior overwritten below) ---
    # NOTE: per-grid-step on purpose; do NOT hoist behind pl.when(program_id==0) -- with a
    #       core-sharded batch axis each TensorCore has its own scratch instance.
    zrow = jnp.zeros((1, wp, w_b), f32)
    pad_ref[pl.ds(0, 1), :, :] = zrow
    pad_ref[pl.ds(hp - 1, 1), :, :] = zrow
    zcol = jnp.zeros((hp, 1, w_b), f32)
    pad_ref[:, pl.ds(0, 1), :] = zcol
    pad_ref[:, pl.ds(wp - 1, 1), :] = zcol

    # ---- conv a (1x1) + folded-BN bias + ReLU -> padded VMEM scratch ----
    xa = x_ref[0].reshape(h * w, cin)                                  # pixels-major
    ha = jnp.dot(xa, wa, preferred_element_type=f32) + ba
    ha = jnp.maximum(ha, 0.0)
    pad_ref[pl.ds(1, h), pl.ds(1, w), :] = ha.reshape(h, w, w_b)

    # ---- conv b: 3x3 grouped conv (pad=1, stride) as ONE im2col matmul (K = 9*w_b) ----
    for dy in range(3):
        for dx in range(3):
            if stride == 1:
                tap = pad_ref[pl.ds(dy, ho), pl.ds(dx, wo), :]
            else:
                tap = pad_ref[pl.ds(dy, ho, stride), pl.ds(dx, wo, stride), :]
            t = dy * 3 + dx
            col_ref[:, pl.ds(t * w_b, w_b)] = tap.reshape(ho * wo, w_b)
    patches = col_ref[...].astype(cdt)                                 # single convert pass
    hb = jnp.dot(patches, wbm, preferred_element_type=f32) + bb
    hb = jnp.maximum(hb, 0.0)                                          # (Ho*Wo, w_b) f32

    # ---- SE: squeeze (global avg pool) -> excite; tiny FCs kept fully in f32 ----
    s = jnp.mean(hb, axis=0, keepdims=True)                            # (1, w_b) f32
    z = jnp.maximum(jnp.dot(s, w1, preferred_element_type=f32) + b1, 0.0)
    g = jax.nn.sigmoid(jnp.dot(z, w2, preferred_element_type=f32) + b2)  # (1, w_b) f32

    # ---- channel gating fused into conv c (1x1) + folded-BN bias (no ReLU) ----
    hg = (hb * g).astype(cdt)
    y = jnp.dot(hg, wc, preferred_element_type=f32) + bc
    o_ref[0] = y.astype(o_ref.dtype)


# ----------------------------- wrapper ------------------------------

def bottleneck_transform(x, p, stride, *, compute_dtype=jnp.bfloat16, input_format="NCHW"):
    dims = p["dims"]
    w_b, w_se, w_out = dims["w_b"], dims["w_se"], dims["w_out"]

    if input_format == "NCHW":
        # TODO(synk): have the producer hand over NHWC/compute-dtype directly
        # (input_format="NHWC") to remove this extra HBM read+write of x.
        x = jnp.transpose(x, (0, 2, 3, 1))
    x = x.astype(compute_dtype)

    n, h, w, cin = x.shape
    hp, wp = h + 2, w + 2
    ho = (h + 2 - 3) // stride + 1
    wo = (w + 2 - 3) // stride + 1

    wslab = p["wslab"].astype(compute_dtype)
    fslab = p["fslab"]

    kernel = functools.partial(_fused_bottleneck_kernel, stride=stride,
                               w_b=w_b, w_se=w_se, w_out=w_out)
    y = pl.pallas_call(
        kernel,
        out_shape=jax.ShapeDtypeStruct((n, ho * wo, w_out), jnp.float32),
        grid=(n,),
        in_specs=[
            pl.BlockSpec((1, h, w, cin), lambda i: (i, 0, 0, 0)),
            pl.BlockSpec(wslab.shape, lambda i: (0, 0)),
            pl.BlockSpec(fslab.shape, lambda i: (0, 0)),
        ],
        out_specs=pl.BlockSpec((1, ho * wo, w_out), lambda i: (i, 0, 0)),
        scratch_shapes=[
            pltpu.VMEM((hp, wp, w_b), jnp.float32),        # zero-padded conv-a activation
            pltpu.VMEM((ho * wo, 9 * w_b), jnp.float32),   # im2col patches
        ],
        compiler_params=pltpu.CompilerParams(
            dimension_semantics=("parallel",),
            vmem_limit_bytes=32 * 1024 * 1024,
        ),
    )(x, wslab, fslab)

    y = y.reshape(n, ho, wo, w_out)
    return jnp.transpose(y, (0, 3, 1, 2))                               # back to NCHW


# ----------------------------- parameters & reference ------------------------------

def make_params(key, w_in, w_out, bm, gw, se_r):
    w_b = int(round(w_out * bm))
    num_gs = w_b // gw
    w_se = int(round(w_in * se_r))
    keys = jax.random.split(key, 12)

    def nrm(k, shape, s=0.1):
        return jax.random.normal(k, shape, jnp.float32) * s

    def bn(k, c):
        k1, k2, k3, k4 = jax.random.split(k, 4)
        gamma = jax.random.uniform(k1, (c,), jnp.float32, 0.5, 1.5)
        beta = nrm(k2, (c,))
        mean = nrm(k3, (c,))
        var = jax.random.uniform(k4, (c,), jnp.float32, 0.5, 1.5)
        return gamma, beta, mean, var

    wa = nrm(keys[0], (w_b, w_in, 1, 1))           # OIHW
    wb = nrm(keys[1], (w_b, gw, 3, 3))             # grouped OIHW (in-per-group = gw)
    w1 = nrm(keys[2], (w_se, w_b, 1, 1)); b1 = nrm(keys[3], (w_se,))
    w2 = nrm(keys[4], (w_b, w_se, 1, 1)); b2 = nrm(keys[5], (w_b,))
    wc = nrm(keys[6], (w_out, w_b, 1, 1))
    a_bn, b_bn, c_bn = bn(keys[7], w_b), bn(keys[8], w_b), bn(keys[9], w_out)

    def fold(bn_p, eps=1e-5):
        g, b, m, v = bn_p
        s = g / jnp.sqrt(v + eps)
        return s, b - m * s

    a_s, a_b = fold(a_bn); b_s, b_b = fold(b_bn); c_s, c_b = fold(c_bn)

    # grouped 3x3 weights -> per-tap block-diagonal dense (w_b, w_b) matrices (in, out).
    # Block-diag is only kept because num_gs is tiny here (<=2); large num_gs should use a
    # per-group contraction to avoid w_b^2 dense work.
    wb_taps = jnp.zeros((9, w_b, w_b), jnp.float32)
    for gi in range(num_gs):
        blk = wb[gi * gw:(gi + 1) * gw]                               # (out, in, 3, 3)
        blk_t = jnp.transpose(blk, (2, 3, 1, 0)).reshape(9, gw, gw)   # (tap, in, out)
        wb_taps = wb_taps.at[:, gi * gw:(gi + 1) * gw, gi * gw:(gi + 1) * gw].set(blk_t)

    # fold BN scale into the conv output channels; only the biases survive in the kernel.
    wa_2d = wa[:, :, 0, 0].T * a_s[None, :]                           # (w_in, w_b)
    wb_flat = (wb_taps * b_s[None, None, :]).reshape(9 * w_b, w_b)    # im2col (9*w_b, w_b)
    wc_2d = wc[:, :, 0, 0].T * c_s[None, :]                           # (w_b, w_out)
    w1_2d = w1[:, :, 0, 0].T                                          # (w_b, w_se)
    w2_2d = w2[:, :, 0, 0].T                                          # (w_se, w_b)

    # ---- pack the 11 operands into 2 slabs (3 kernel inputs incl. x) ----
    wcols = max(w_b, w_out)
    wslab = jnp.zeros((w_in + 10 * w_b, wcols), jnp.float32)
    wslab = wslab.at[:w_in, :w_b].set(wa_2d)
    wslab = wslab.at[w_in:w_in + 9 * w_b, :w_b].set(wb_flat)
    wslab = wslab.at[w_in + 9 * w_b:, :w_out].set(wc_2d)

    fcols = max(w_b, w_out, w_se)
    fslab = jnp.zeros((5 + w_b + w_se, fcols), jnp.float32)
    fslab = fslab.at[0, :w_b].set(a_b)
    fslab = fslab.at[1, :w_b].set(b_b)
    fslab = fslab.at[2, :w_out].set(c_b)
    fslab = fslab.at[3, :w_se].set(b1)
    fslab = fslab.at[4, :w_b].set(b2)
    fslab = fslab.at[5:5 + w_b, :w_se].set(w1_2d)
    fslab = fslab.at[5 + w_b:, :w_b].set(w2_2d)

    kernel_p = dict(wslab=wslab, fslab=fslab,
                    dims=dict(w_b=w_b, w_se=w_se, w_out=w_out))
    ref_p = dict(wa=wa, wb=wb, w1=w1, b1=b1, w2=w2, b2=b2, wc=wc,
                 a_bn=a_bn, b_bn=b_bn, c_bn=c_bn)
    return kernel_p, ref_p, num_gs


def reference_forward(x, p, stride, num_gs):
    """Pure-JAX NCHW reference mirroring the PyTorch module (BN in inference mode)."""
    dn = ("NCHW", "OIHW", "NCHW")
    prec = lax.Precision.HIGHEST

    def bn(y, bn_p, eps=1e-5):
        g, b, m, v = bn_p
        s = g / jnp.sqrt(v + eps)
        return y * s[None, :, None, None] + (b - m * s)[None, :, None, None]

    y = lax.conv_general_dilated(x, p["wa"], (1, 1), "VALID", dimension_numbers=dn, precision=prec)
    y = jnp.maximum(bn(y, p["a_bn"]), 0.0)
    y = lax.conv_general_dilated(y, p["wb"], (stride, stride), ((1, 1), (1, 1)),
                                 dimension_numbers=dn, feature_group_count=num_gs, precision=prec)
    y = jnp.maximum(bn(y, p["b_bn"]), 0.0)
    s = jnp.mean(y, axis=(2, 3), keepdims=True)
    z = lax.conv_general_dilated(s, p["w1"], (1, 1), "VALID", dimension_numbers=dn,
                                 precision=prec) + p["b1"][None, :, None, None]
    z = jnp.maximum(z, 0.0)
    g = jax.nn.sigmoid(lax.conv_general_dilated(z, p["w2"], (1, 1), "VALID", dimension_numbers=dn,
                                                precision=prec) + p["b2"][None, :, None, None])
    y = y * g
    y = lax.conv_general_dilated(y, p["wc"], (1, 1), "VALID", dimension_numbers=dn, precision=prec)
    return bn(y, p["c_bn"])


# ----------------------------- main ------------------------------

if __name__ == "__main__":
    # RegNet-style config: w_in=8, w_out=16, bm=1.0, gw=8 (-> 2 groups), se_r=0.25.
    # Batch 4 so a core-sharded v7x grid still has >=2 pipelined steps per TensorCore.
    N, w_in, H, W = 4, 8, 16, 16
    w_out, bm, gw, se_r = 16, 1.0, 8, 0.25

    key = jax.random.PRNGKey(0)
    kx, kp = jax.random.split(key)
    x = jax.random.normal(kx, (N, w_in, H, W), jnp.float32)           # NCHW, like PyTorch

    kernel_p, ref_p, num_gs = make_params(kp, w_in, w_out, bm, gw, se_r)

    for stride in (2, 1):                                             # stride-2 and stride-1 blocks
        ho = (H + 2 - 3) // stride + 1
        wo = (W + 2 - 3) // stride + 1
        y_ref = jax.block_until_ready(reference_forward(x, ref_p, stride, num_gs))

        # f32-operand variant: pins layout/indexing correctness at tight tolerance
        # (tolerance covers possible MXU multi-pass rounding, not layout bugs).
        y32 = jax.block_until_ready(
            bottleneck_transform(x, kernel_p, stride, compute_dtype=jnp.float32))
        assert y32.shape == (N, w_out, ho, wo), y32.shape
        err32 = float(jnp.max(jnp.abs(y32 - y_ref)))
        assert jnp.allclose(y32, y_ref, atol=5e-3, rtol=5e-3), f"stride={stride} f32 err {err32}"

        # production bf16-operand variant (f32 MXU accumulation, SE in f32).
        y16 = jax.block_until_ready(
            bottleneck_transform(x, kernel_p, stride, compute_dtype=jnp.bfloat16))
        assert y16.shape == (N, w_out, ho, wo), y16.shape
        err16 = float(jnp.max(jnp.abs(y16 - y_ref)))
        assert jnp.allclose(y16, y_ref, atol=2e-2, rtol=2e-2), f"stride={stride} bf16 err {err16}"

    print("KERNEL_OK")
</pallas_src>

<mosaic_0001>
module attributes {stable_mosaic.version = 11 : i64} {
  func.func @_fused_bottleneck_kernel(%arg0: i32, %arg1: memref<1x16x16x8xf32, #tpu.memory_space<vmem>>, %arg2: memref<168x16xf32, #tpu.memory_space<vmem>>, %arg3: memref<23x16xf32, #tpu.memory_space<vmem>>, %arg4: memref<1x64x16xf32, #tpu.memory_space<vmem>>, %arg5: memref<18x18x16xf32, #tpu.memory_space<vmem>>, %arg6: memref<64x144xf32, #tpu.memory_space<vmem>>) attributes {dimension_semantics = [#tpu.dimension_semantics<parallel>], iteration_bounds = array<i64: 4>, scalar_prefetch = 0 : i64, scratch_operands = 2 : i64, tpu.core_type = #tpu.core_type<tc>, window_params = [{transform_indices = @transform_0, window_bounds = array<i64: 1, 16, 16, 8>}, {pipeline_mode = #tpu.pipeline_mode<synchronous>, transform_indices = @transform_1, window_bounds = array<i64: 168, 16>}, {pipeline_mode = #tpu.pipeline_mode<synchronous>, transform_indices = @transform_2, window_bounds = array<i64: 23, 16>}, {transform_indices = @transform_3, window_bounds = array<i64: 1, 64, 16>}]} {
    %c0 = arith.constant 0 : index
    %c0_0 = arith.constant 0 : index
    %0 = vector.load %arg2[%c0, %c0_0] : memref<168x16xf32, #tpu.memory_space<vmem>>, vector<8x16xf32>
    %c8 = arith.constant 8 : index
    %c0_1 = arith.constant 0 : index
    %1 = vector.load %arg2[%c8, %c0_1] : memref<168x16xf32, #tpu.memory_space<vmem>>, vector<144x16xf32>
    %c152 = arith.constant 152 : index
    %c0_2 = arith.constant 0 : index
    %2 = vector.load %arg2[%c152, %c0_2] : memref<168x16xf32, #tpu.memory_space<vmem>>, vector<16x16xf32>
    %c0_3 = arith.constant 0 : index
    %c0_4 = arith.constant 0 : index
    %3 = vector.load %arg3[%c0_3, %c0_4] : memref<23x16xf32, #tpu.memory_space<vmem>>, vector<1x16xf32>
    %c1 = arith.constant 1 : index
    %c0_5 = arith.constant 0 : index
    %4 = vector.load %arg3[%c1, %c0_5] : memref<23x16xf32, #tpu.memory_space<vmem>>, vector<1x16xf32>
    %c2 = arith.constant 2 : index
    %c0_6 = arith.constant 0 : index
    %5 = vector.load %arg3[%c2, %c0_6] : memref<23x16xf32, #tpu.memory_space<vmem>>, vector<1x16xf32>
    %c3 = arith.constant 3 : index
    %c0_7 = arith.constant 0 : index
    %6 = vector.load %arg3[%c3, %c0_7] : memref<23x16xf32, #tpu.memory_space<vmem>>, vector<1x2xf32>
    %c4 = arith.constant 4 : index
    %c0_8 = arith.constant 0 : index
    %7 = vector.load %arg3[%c4, %c0_8] : memref<23x16xf32, #tpu.memory_space<vmem>>, vector<1x16xf32>
    %c5 = arith.constant 5 : index
    %c0_9 = arith.constant 0 : index
    %8 = vector.load %arg3[%c5, %c0_9] : memref<23x16xf32, #tpu.memory_space<vmem>>, vector<16x2xf32>
    %c21 = arith.constant 21 : index
    %c0_10 = arith.constant 0 : index
    %9 = vector.load %arg3[%c21, %c0_10] : memref<23x16xf32, #tpu.memory_space<vmem>>, vector<2x16xf32>
    %cst = arith.constant 0.000000e+00 : f32
    %10 = vector.broadcast %cst : f32 to vector<1x18x16xf32>
    %c0_11 = arith.constant 0 : index
    %c0_12 = arith.constant 0 : index
    %c0_13 = arith.constant 0 : index
    %11 = vector.load %arg5[%c0_11, %c0_12, %c0_13] : memref<18x18x16xf32, #tpu.memory_space<vmem>>, vector<1x18x16xf32>
    tpu.vector_store %arg5[%c0_11, %c0_12, %c0_13], %10 {strides = array<i32>} : memref<18x18x16xf32, #tpu.memory_space<vmem>>, vector<1x18x16xf32>,
    %c17 = arith.constant 17 : index
    %c0_14 = arith.constant 0 : index
    %c0_15 = arith.constant 0 : index
    %12 = vector.load %arg5[%c17, %c0_14, %c0_15] : memref<18x18x16xf32, #tpu.memory_space<vmem>>, vector<1x18x16xf32>
    tpu.vector_store %arg5[%c17, %c0_14, %c0_15], %10 {strides = array<i32>} : memref<18x18x16xf32, #tpu.memory_space<vmem>>, vector<1x18x16xf32>,
    %cst_16 = arith.constant 0.000000e+00 : f32
    %13 = vector.broadcast %cst_16 : f32 to vector<18x1x16xf32>
    %c0_17 = arith.constant 0 : index
    %c0_18 = arith.constant 0 : index
    %c0_19 = arith.constant 0 : index
    %14 = vector.load %arg5[%c0_17, %c0_18, %c0_19] : memref<18x18x16xf32, #tpu.memory_space<vmem>>, vector<18x1x16xf32>
    tpu.vector_store %arg5[%c0_17, %c0_18, %c0_19], %13 {strides = array<i32>} : memref<18x18x16xf32, #tpu.memory_space<vmem>>, vector<18x1x16xf32>,
    %c0_20 = arith.constant 0 : index
    %c17_21 = arith.constant 17 : index
    %c0_22 = arith.constant 0 : index
    %15 = vector.load %arg5[%c0_20, %c17_21, %c0_22] : memref<18x18x16xf32, #tpu.memory_space<vmem>>, vector<18x1x16xf32>
    tpu.vector_store %arg5[%c0_20, %c17_21, %c0_22], %13 {strides = array<i32>} : memref<18x18x16xf32, #tpu.memory_space<vmem>>, vector<18x1x16xf32>,
    %c0_23 = arith.constant 0 : index
    %c0_24 = arith.constant 0 : index
    %c0_25 = arith.constant 0 : index
    %c0_26 = arith.constant 0 : index
    %16 = vector.load %arg1[%c0_23, %c0_24, %c0_25, %c0_26] : memref<1x16x16x8xf32, #tpu.memory_space<vmem>>, vector<1x16x16x8xf32>
    %17 = vector.shape_cast %16 : vector<1x16x16x8xf32> to vector<16x16x8xf32>
    %18 = vector.shape_cast %17 : vector<16x16x8xf32> to vector<256x8xf32>
    %cst_27 = arith.constant dense<0.000000e+00> : vector<256x16xf32>
    %19 = tpu.matmul %18, %0, %cst_27 {dimension_numbers = #tpu.dot_dimension_numbers<[1], [0], [0], [1], [0, 0, 1, 1], [], []>} : vector<256x8xf32>, vector<8x16xf32>, vector<256x16xf32> -> vector<256x16xf32>
    %20 = vector.broadcast %3 : vector<1x16xf32> to vector<256x16xf32>
    %21 = arith.addf %19, %20 : vector<256x16xf32>
    %cst_28 = arith.constant 0.000000e+00 : f32
    %22 = vector.broadcast %cst_28 : f32 to vector<256x16xf32>
    %23 = arith.maximumf %21, %22 : vector<256x16xf32>
    %24 = vector.shape_cast %23 : vector<256x16xf32> to vector<16x16x16xf32>
    %c1_29 = arith.constant 1 : index
    %c1_30 = arith.constant 1 : index
    %c0_31 = arith.constant 0 : index
    %25 = vector.load %arg5[%c1_29, %c1_30, %c0_31] : memref<18x18x16xf32, #tpu.memory_space<vmem>>, vector<16x16x16xf32>
    tpu.vector_store %arg5[%c1_29, %c1_30, %c0_31], %24 {strides = array<i32>} : memref<18x18x16xf32, #tpu.memory_space<vmem>>, vector<16x16x16xf32>,
    %c0_32 = arith.constant 0 : index
    %c0_33 = arith.constant 0 : index
    %c0_34 = arith.constant 0 : index
    %26 = tpu.strided_load %arg5[%c0_32, %c0_33, %c0_34] {strides = array<i32: 2, 2, 1>} : memref<18x18x16xf32, #tpu.memory_space<vmem>>, vector<8x8x16xf32>
    %27 = vector.shape_cast %26 : vector<8x8x16xf32> to vector<64x16xf32>
    %c0_35 = arith.constant 0 : index
    %c0_36 = arith.constant 0 : index
    %28 = vector.load %arg6[%c0_35, %c0_36] : memref<64x144xf32, #tpu.memory_space<vmem>>, vector<64x16xf32>
    tpu.vector_store %arg6[%c0_35, %c0_36], %27 {strides = array<i32>} : memref<64x144xf32, #tpu.memory_space<vmem>>, vector<64x16xf32>,
    %c0_37 = arith.constant 0 : index
    %c1_38 = arith.constant 1 : index
    %c0_39 = arith.constant 0 : index
    %29 = tpu.strided_load %arg5[%c0_37, %c1_38, %c0_39] {strides = array<i32: 2, 2, 1>} : memref<18x18x16xf32, #tpu.memory_space<vmem>>, vector<8x8x16xf32>
    %30 = vector.shape_cast %29 : vector<8x8x16xf32> to vector<64x16xf32>
    %c0_40 = arith.constant 0 : index
    %c16 = arith.constant 16 : index
    %31 = vector.load %arg6[%c0_40, %c16] : memref<64x144xf32, #tpu.memory_space<vmem>>, vector<64x16xf32>
    tpu.vector_store %arg6[%c0_40, %c16], %30 {strides = array<i32>} : memref<64x144xf32, #tpu.memory_space<vmem>>, vector<64x16xf32>,
    %c0_41 = arith.constant 0 : index
    %c2_42 = arith.constant 2 : index
    %c0_43 = arith.constant 0 : index
    %32 = tpu.strided_load %arg5[%c0_41, %c2_42, %c0_43] {strides = array<i32: 2, 2, 1>} : memref<18x18x16xf32, #tpu.memory_space<vmem>>, vector<8x8x16xf32>
    %33 = vector.shape_cast %32 : vector<8x8x16xf32> to vector<64x16xf32>
    %c0_44 = arith.constant 0 : index
    %c32 = arith.constant 32 : index
    %34 = vector.load %arg6[%c0_44, %c32] : memref<64x144xf32, #tpu.memory_space<vmem>>, vector<64x16xf32>
    tpu.vector_store %arg6[%c0_44, %c32], %33 {strides = array<i32>} : memref<64x144xf32, #tpu.memory_space<vmem>>, vector<64x16xf32>,
    %c1_45 = arith.constant 1 : index
    %c0_46 = arith.constant 0 : index
    %c0_47 = arith.constant 0 : index
    %35 = tpu.strided_load %arg5[%c1_45, %c0_46, %c0_47] {strides = array<i32: 2, 2, 1>} : memref<18x18x16xf32, #tpu.memory_space<vmem>>, vector<8x8x16xf32>
    %36 = vector.shape_cast %35 : vector<8x8x16xf32> to vector<64x16xf32>
    %c0_48 = arith.constant 0 : index
    %c48 = arith.constant 48 : index
    %37 = vector.load %arg6[%c0_48, %c48] : memref<64x144xf32, #tpu.memory_space<vmem>>, vector<64x16xf32>
    tpu.vector_store %arg6[%c0_48, %c48], %36 {strides = array<i32>} : memref<64x144xf32, #tpu.memory_space<vmem>>, vector<64x16xf32>,
    %c1_49 = arith.constant 1 : index
    %c1_50 = arith.constant 1 : index
    %c0_51 = arith.constant 0 : index
    %38 = tpu.strided_load %arg5[%c1_49, %c1_50, %c0_51] {strides = array<i32: 2, 2, 1>} : memref<18x18x16xf32, #tpu.memory_space<vmem>>, vector<8x8x16xf32>
    %39 = vector.shape_cast %38 : vector<8x8x16xf32> to vector<64x16xf32>
    %c0_52 = arith.constant 0 : index
    %c64 = arith.constant 64 : index
    %40 = vector.load %arg6[%c0_52, %c64] : memref<64x144xf32, #tpu.memory_space<vmem>>, vector<64x16xf32>
    tpu.vector_store %arg6[%c0_52, %c64], %39 {strides = array<i32>} : memref<64x144xf32, #tpu.memory_space<vmem>>, vector<64x16xf32>,
    %c1_53 = arith.constant 1 : index
    %c2_54 = arith.constant 2 : index
    %c0_55 = arith.constant 0 : index
    %41 = tpu.strided_load %arg5[%c1_53, %c2_54, %c0_55] {strides = array<i32: 2, 2, 1>} : memref<18x18x16xf32, #tpu.memory_space<vmem>>, vector<8x8x16xf32>
    %42 = vector.shape_cast %41 : vector<8x8x16xf32> to vector<64x16xf32>
    %c0_56 = arith.constant 0 : index
    %c80 = arith.constant 80 : index
    %43 = vector.load %arg6[%c0_56, %c80] : memref<64x144xf32, #tpu.memory_space<vmem>>, vector<64x16xf32>
    tpu.vector_store %arg6[%c0_56, %c80], %42 {strides = array<i32>} : memref<64x144xf32, #tpu.memory_space<vmem>>, vector<64x16xf32>,
    %c2_57 = arith.constant 2 : index
    %c0_58 = arith.constant 0 : index
    %c0_59 = arith.constant 0 : index
    %44 = tpu.strided_load %arg5[%c2_57, %c0_58, %c0_59] {strides = array<i32: 2, 2, 1>} : memref<18x18x16xf32, #tpu.memory_space<vmem>>, vector<8x8x16xf32>
    %45 = vector.shape_cast %44 : vector<8x8x16xf32> to vector<64x16xf32>
    %c0_60 = arith.constant 0 : index
    %c96 = arith.constant 96 : index
    %46 = vector.load %arg6[%c0_60, %c96] : memref<64x144xf32, #tpu.memory_space<vmem>>, vector<64x16xf32>
    tpu.vector_store %arg6[%c0_60, %c96], %45 {strides = array<i32>} : memref<64x144xf32, #tpu.memory_space<vmem>>, vector<64x16xf32>,
    %c2_61 = arith.constant 2 : index
    %c1_62 = arith.constant 1 : index
    %c0_63 = arith.constant 0 : index
    %47 = tpu.strided_load %arg5[%c2_61, %c1_62, %c0_63] {strides = array<i32: 2, 2, 1>} : memref<18x18x16xf32, #tpu.memory_space<vmem>>, vector<8x8x16xf32>
    %48 = vector.shape_cast %47 : vector<8x8x16xf32> to vector<64x16xf32>
    %c0_64 = arith.constant 0 : index
    %c112 = arith.constant 112 : index
    %49 = vector.load %arg6[%c0_64, %c112] : memref<64x144xf32, #tpu.memory_space<vmem>>, vector<64x16xf32>
    tpu.vector_store %arg6[%c0_64, %c112], %48 {strides = array<i32>} : memref<64x144xf32, #tpu.memory_space<vmem>>, vector<64x16xf32>,
    %c2_65 = arith.constant 2 : index
    %c2_66 = arith.constant 2 : index
    %c0_67 = arith.constant 0 : index
    %50 = tpu.strided_load %arg5[%c2_65, %c2_66, %c0_67] {strides = array<i32: 2, 2, 1>} : memref<18x18x16xf32, #tpu.memory_space<vmem>>, vector<8x8x16xf32>
    %51 = vector.shape_cast %50 : vector<8x8x16xf32> to vector<64x16xf32>
    %c0_68 = arith.constant 0 : index
    %c128 = arith.constant 128 : index
    %52 = vector.load %arg6[%c0_68, %c128] : memref<64x144xf32, #tpu.memory_space<vmem>>, vector<64x16xf32>
    tpu.vector_store %arg6[%c0_68, %c128], %51 {strides = array<i32>} : memref<64x144xf32, #tpu.memory_space<vmem>>, vector<64x16xf32>,
    %c0_69 = arith.constant 0 : index
    %c0_70 = arith.constant 0 : index
    %53 = vector.load %arg6[%c0_69, %c0_70] : memref<64x144xf32, #tpu.memory_space<vmem>>, vector<64x144xf32>
    %cst_71 = arith.constant dense<0.000000e+00> : vector<64x16xf32>
    %54 = tpu.matmul %53, %1, %cst_71 {dimension_numbers = #tpu.dot_dimension_numbers<[1], [0], [0], [1], [0, 0, 1, 1], [], []>} : vector<64x144xf32>, vector<144x16xf32>, vector<64x16xf32> -> vector<64x16xf32>
    %55 = vector.broadcast %4 : vector<1x16xf32> to vector<64x16xf32>
    %56 = arith.addf %54, %55 : vector<64x16xf32>
    %cst_72 = arith.constant 0.000000e+00 : f32
    %57 = vector.broadcast %cst_72 : f32 to vector<64x16xf32>
    %58 = arith.maximumf %56, %57 : vector<64x16xf32>
    %cst_73 = arith.constant dense<0.000000e+00> : vector<16xf32>
    %59 = vector.multi_reduction <add>, %58, %cst_73 [0] : vector<64x16xf32> to vector<16xf32>
    %60 = vector.shape_cast %59 : vector<16xf32> to vector<1x16xf32>
    %cst_74 = arith.constant 6.400000e+01 : f32
    %61 = vector.broadcast %cst_74 : f32 to vector<1x16xf32>
    %62 = arith.divf %60, %61 : vector<1x16xf32>
    %cst_75 = arith.constant dense<0.000000e+00> : vector<1x2xf32>
    %63 = tpu.matmul %62, %8, %cst_75 {dimension_numbers = #tpu.dot_dimension_numbers<[1], [0], [0], [1], [0, 0, 1, 1], [], []>} : vector<1x16xf32>, vector<16x2xf32>, vector<1x2xf32> -> vector<1x2xf32>
    %64 = arith.addf %63, %6 : vector<1x2xf32>
    %cst_76 = arith.constant 0.000000e+00 : f32
    %65 = vector.broadcast %cst_76 : f32 to vector<1x2xf32>
    %66 = arith.maximumf %64, %65 : vector<1x2xf32>
    %cst_77 = arith.constant dense<0.000000e+00> : vector<1x16xf32>
    %67 = tpu.matmul %66, %9, %cst_77 {dimension_numbers = #tpu.dot_dimension_numbers<[1], [0], [0], [1], [0, 0, 1, 1], [], []>} : vector<1x2xf32>, vector<2x16xf32>, vector<1x16xf32> -> vector<1x16xf32>
    %68 = arith.addf %67, %7 : vector<1x16xf32>
    %69 = arith.negf %68 : vector<1x16xf32>
    %70 = math.exp %69 : vector<1x16xf32>
    %cst_78 = arith.constant 1.000000e+00 : f32
    %71 = vector.broadcast %cst_78 : f32 to vector<1x16xf32>
    %72 = arith.addf %71, %70 : vector<1x16xf32>
    %73 = arith.divf %71, %72 : vector<1x16xf32>
    %74 = vector.broadcast %73 : vector<1x16xf32> to vector<64x16xf32>
    %75 = arith.mulf %58, %74 : vector<64x16xf32>
    %cst_79 = arith.constant dense<0.000000e+00> : vector<64x16xf32>
    %76 = tpu.matmul %75, %2, %cst_79 {dimension_numbers = #tpu.dot_dimension_numbers<[1], [0], [0], [1], [0, 0, 1, 1], [], []>} : vector<64x16xf32>, vector<16x16xf32>, vector<64x16xf32> -> vector<64x16xf32>
    %77 = vector.broadcast %5 : vector<1x16xf32> to vector<64x16xf32>
    %78 = arith.addf %76, %77 : vector<64x16xf32>
    %c0_80 = arith.constant 0 : index
    %c0_81 = arith.constant 0 : index
    %c0_82 = arith.constant 0 : index
    %79 = vector.load %arg4[%c0_80, %c0_81, %c0_82] : memref<1x64x16xf32, #tpu.memory_space<vmem>>, vector<1x64x16xf32>
    %80 = vector.shape_cast %79 : vector<1x64x16xf32> to vector<64x16xf32>
    %81 = vector.shape_cast %78 : vector<64x16xf32> to vector<1x64x16xf32>
    tpu.vector_store %arg4[%c0_80, %c0_81, %c0_82], %81 {strides = array<i32>} : memref<1x64x16xf32, #tpu.memory_space<vmem>>, vector<1x64x16xf32>,
    return
  }
  func.func @transform_0(%arg0: i32) -> (i32, i32, i32, i32) {
    %c0_i32 = arith.constant 0 : i32
    %c0_i32_0 = arith.constant 0 : i32
    %c0_i32_1 = arith.constant 0 : i32
    %c0_i32_2 = arith.constant 0 : i32
    return %arg0, %c0_i32, %c0_i32_0, %c0_i32_1 : i32, i32, i32, i32
  }
  func.func @transform_1(%arg0: i32) -> (i32, i32) {
    %c0_i32 = arith.constant 0 : i32
    %c0_i32_0 = arith.constant 0 : i32
    %c0_i32_1 = arith.constant 0 : i32
    return %c0_i32, %c0_i32_0 : i32, i32
  }
  func.func @transform_2(%arg0: i32) -> (i32, i32) {
    %c0_i32 = arith.constant 0 : i32
    %c0_i32_0 = arith.constant 0 : i32
    %c0_i32_1 = arith.constant 0 : i32
    return %c0_i32, %c0_i32_0 : i32, i32
  }
  func.func @transform_3(%arg0: i32) -> (i32, i32, i32) {
    %c0_i32 = arith.constant 0 : i32
    %c0_i32_0 = arith.constant 0 : i32
    %c0_i32_1 = arith.constant 0 : i32
    return %arg0, %c0_i32, %c0_i32_0 : i32, i32, i32
  }
}

</mosaic_0001>

<llo_original>
// kernel: tpu_custom_call.1
$region0: #{tpu_custom_call.1}
  #allocation0 [shape = 'u32[]', space=smem, size = 0x4, offset = 0x4, fixed_abs, tag = 'smem constant byte address 0x4 - core index']
  #allocation1 [shape = 'u32[72,128]{1,0:T(1,128)}', space=vmem, size = 0x9000, scoped, tag = 'internal scratch']
  #allocation2 [shape = 'f32[18,18,16]{2,1,0:T(8,128)}', space=vmem, size = 0x36000, scoped, tag = 'scratch operand']
  #allocation3 [shape = 'f32[64,144]{1,0:T(8,128)}', space=vmem, size = 0x10000, scoped, tag = 'scratch operand']
  %s0 = inlined_call_operand.vmem [shape: f32[4,16,16,8], index: 0, kind: input, shape index: {}]
  %s1 = inlined_call_operand.vmem [shape: f32[168,16], index: 1, kind: input, shape index: {}]
  %s2 = inlined_call_operand.vmem [shape: f32[23,16], index: 2, kind: input, shape index: {}]
  %s3 = inlined_call_operand.vmem [shape: f32[4,64,16], index: 3, kind: output, shape index: {}]
  %s4 = sld [smem:[#allocation0]]
  $region45: #{tpu_custom_call.1} parent=0
    _
  %s6 = ssub.s32 1, %s4
  %s7 = scalar_select 0, %s6, %s4
  loop: start=0, step=1, limit=6
  $region2: #{tpu_custom_call.1} parent=0 // loop_pre_header
    _
  $region3: #{tpu_custom_call.1} parent=0 // loop_header
    %s9 = sphi 0, %s13
    %p10 = scmp.ge.s32.totalorder %s9, 6
    %s19 = sphi 0, %s21
    %s22 = sphi 0, %s19
    %s23 = sphi 0, %s22
    %s39 = sphi 0, %s23
    %s43 = sphi 0, %s43
    %s45 = sphi 0, %s43
    %s46 = sphi 0, %s45
    %s60 = sphi 0, %s46
    %s64 = sphi 0, %s64
    %s66 = sphi 0, %s64
    %s67 = sphi 0, %s66
    %s81 = sphi 0, %s67
    %s87 = sphi 0, %s89
    %s90 = sphi 0, %s87
    %s91 = sphi 0, %s90
    %s107 = sphi 0, %s91
  $region4: #{tpu_custom_call.1} parent=0 // loop_header_branch
    %12 = sbr.rel (%p10) target = $region8
  $region5: #{tpu_custom_call.1} parent=0 // loop_body
    %s14 = ssub.s32 %s9, 1
    %s15 = ssub.s32 %s9, 2
    %s16 = sadd.s32 %s9, 1
    %s17 = ssub.s32 %s9, %s16
    %p18 = scmp.eq.s32.totalorder %s17, 0
    %s20 = sadd.s32 %s19, 1
    %s21 = scalar_select %p18, %s19, %s20
    %p24 = pneg %p18
    %p25 = scmp.eq.s32.totalorder %s9, 3
    %p26 = por %p24, %p25
    %p27 = scmp.ne.s32.totalorder %s19, %s22
    %p28 = scmp.eq.s32.totalorder %s9, 0
    %p29 = por %p27, %p28
    %p30 = scmp.ne.s32.totalorder %s19, %s22
    %p31 = scmp.eq.s32.totalorder %s14, 3
    %p32 = por %p30, %p31
    %p33 = scmp.ne.s32.totalorder %s22, %s23
    %p34 = scmp.eq.s32.totalorder %s14, 0
    %p35 = por %p33, %p34
    %p36 = scmp.ne.s32.totalorder %s22, %s23
    %p37 = scmp.eq.s32.totalorder %s15, 3
    %p38 = por %p36, %p37
    %p40 = scmp.ne.s32.totalorder %s23, %s39
    %p41 = scmp.eq.s32.totalorder %s15, 0
    %p42 = por %p40, %p41
    %s44 = sadd.s32 %s43, 1
    %p47 = scmp.eq.s32.totalorder %s9, 3
    %p48 = scmp.ne.s32.totalorder %s43, %s45
    %p49 = scmp.eq.s32.totalorder %s9, 0
    %p50 = por %p48, %p49
    %p51 = scmp.ne.s32.totalorder %s43, %s45
    %p52 = scmp.eq.s32.totalorder %s14, 3
    %p53 = por %p51, %p52
    %p54 = scmp.ne.s32.totalorder %s45, %s46
    %p55 = scmp.eq.s32.totalorder %s14, 0
    %p56 = por %p54, %p55
    %p57 = scmp.ne.s32.totalorder %s45, %s46
    %p58 = scmp.eq.s32.totalorder %s15, 3
    %p59 = por %p57, %p58
    %p61 = scmp.ne.s32.totalorder %s46, %s60
    %p62 = scmp.eq.s32.totalorder %s15, 0
    %p63 = por %p61, %p62
    %s65 = sadd.s32 %s64, 1
    %p68 = scmp.eq.s32.totalorder %s9, 3
    %p69 = scmp.ne.s32.totalorder %s64, %s66
    %p70 = scmp.eq.s32.totalorder %s9, 0
    %p71 = por %p69, %p70
    %p72 = scmp.ne.s32.totalorder %s64, %s66
    %p73 = scmp.eq.s32.totalorder %s14, 3
    %p74 = por %p72, %p73
    %p75 = scmp.ne.s32.totalorder %s66, %s67
    %p76 = scmp.eq.s32.totalorder %s14, 0
    %p77 = por %p75, %p76
    %p78 = scmp.ne.s32.totalorder %s66, %s67
    %p79 = scmp.eq.s32.totalorder %s15, 3
    %p80 = por %p78, %p79
    %p82 = scmp.ne.s32.totalorder %s67, %s81
    %p83 = scmp.eq.s32.totalorder %s15, 0
    %p84 = por %p82, %p83
    %s85 = ssub.s32 %s9, %s16
    %p86 = scmp.eq.s32.totalorder %s85, 0
    %s88 = sadd.s32 %s87, 1
    %s89 = scalar_select %p86, %s87, %s88
    %p92 = pneg %p86
    %p93 = scmp.eq.s32.totalorder %s9, 3
    %p94 = por %p92, %p93
    %p95 = scmp.ne.s32.totalorder %s87, %s90
    %p96 = scmp.eq.s32.totalorder %s9, 0
    %p97 = por %p95, %p96
    %p98 = scmp.ne.s32.totalorder %s87, %s90
    %p99 = scmp.eq.s32.totalorder %s14, 3
    %p100 = por %p98, %p99
    %p101 = scmp.ne.s32.totalorder %s90, %s91
    %p102 = scmp.eq.s32.totalorder %s14, 0
    %p103 = por %p101, %p102
    %p104 = scmp.ne.s32.totalorder %s90, %s91
    %p105 = scmp.eq.s32.totalorder %s15, 3
    %p106 = por %p104, %p105
    %p108 = scmp.ne.s32.totalorder %s91, %s107
    %p109 = scmp.eq.s32.totalorder %s15, 0
    %p110 = por %p108, %p109
    %p111 = scmp.le.s32.totalorder 1, %s9
    %p112 = scmp.lt.s32.totalorder %s9, 5
    %p113 = pnand %p111, %p112
    %p114 = pneg %p113
    // Predicated region
    $region9: #{tpu_custom_call.1} parent=5 // pred_check
      _
    $region10: #{tpu_custom_call.1} parent=5 // pred_check_branch
      %116 = sbr.rel (%p113) target = $region12
    $region11: #{tpu_custom_call.1} parent=5 // pred_region
      %s117 = ssub.s32 %s9, 1
      // Predicated region
      $region13: #{tpu_custom_call.1} parent=11 // pred_check
        %p118 = pneg %p56
      $region14: #{tpu_custom_call.1} parent=11 // pred_check_branch
        %120 = sbr.rel (%p118) target = $region16
      $region15: #{tpu_custom_call.1} parent=11 // pred_region
        _
      $region16: #{tpu_custom_call.1} parent=11 // pred_fallthru
        _
      // Predicated region
      $region17: #{tpu_custom_call.1} parent=11 // pred_check
        %p121 = pneg %p77
      $region18: #{tpu_custom_call.1} parent=11 // pred_check_branch
        %123 = sbr.rel (%p121) target = $region20
      $region19: #{tpu_custom_call.1} parent=11 // pred_region
        _
      $region20: #{tpu_custom_call.1} parent=11 // pred_fallthru
        _
    $region12: #{tpu_custom_call.1} parent=5 // pred_fallthru
      _
    %p124 = scmp.lt.s32.totalorder %s9, 4
    // Predicated region
    $region21: #{tpu_custom_call.1} parent=5 // pred_check
      %p125 = pneg %p124
    $region22: #{tpu_custom_call.1} parent=5 // pred_check_branch
      %127 = sbr.rel (%p125) target = $region24
    $region23: #{tpu_custom_call.1} parent=5 // pred_region
      // Predicated region
      $region25: #{tpu_custom_call.1} parent=23 // pred_check
        %p128 = pneg %p29
      $region26: #{tpu_custom_call.1} parent=23 // pred_check_branch
        %130 = sbr.rel (%p128) target = $region28
      $region27: #{tpu_custom_call.1} parent=23 // pred_region
        %p131 = scmp.lt.s32.totalorder %s9, 3
        %s132 = scalar_select %p131, %s9, 3
        %s133 = smul.addr %s132, 32
        %s134 = smul.addr %s133, 8
        %s135 = scalar_lea.vmem %s0, %s134
      $region28: #{tpu_custom_call.1} parent=23 // pred_fallthru
        _
    $region24: #{tpu_custom_call.1} parent=5 // pred_fallthru
      _
    %p136 = scmp.le.s32.totalorder 1, %s9
    %p137 = scmp.lt.s32.totalorder %s9, 5
    %p138 = pnand %p136, %p137
    %p139 = pneg %p138
    // Predicated region
    $region29: #{tpu_custom_call.1} parent=5 // pred_check
      _
    $region30: #{tpu_custom_call.1} parent=5 // pred_check_branch
      %141 = sbr.rel (%p138) target = $region32
    $region31: #{tpu_custom_call.1} parent=5 // pred_region
      %s142 = ssub.s32 %s9, 1
      %p143 = scmp.lt.s32.totalorder %s14, 3
      %s144 = scalar_select %p143, %s14, 3
      %s145 = smul.addr %s144, 32
      %s146 = smul.addr %s145, 8
      %s147 = scalar_lea.vmem %s0, %s146
      %p148 = pneg %p35
      %p149 = pneg %p32
      %p150 = pneg %p56
      %p151 = pneg %p53
      %p152 = pneg %p77
      %p153 = pneg %p74
      %p154 = pneg %p103
      %p155 = pneg %p100
      %p156 = scmp.lt.s32.totalorder %s14, 3
      %s157 = scalar_select %p156, %s14, 3
      %s158 = smul.addr %s157, 8
      %s159 = smul.addr %s158, 8
      %s160 = scalar_lea.vmem %s3, %s159
      %p161 = scmp.lt.s32.totalorder %s14, 3
      %s162 = scalar_select %p161, %s14, 3
      %s163 = smul.addr %s162, 32
      %s164 = smul.addr %s163, 8
      %s165 = scalar_lea.vmem %s0, %s164
      %p166 = scmp.lt.s32.totalorder %s14, 3
      %s167 = scalar_select %p166, %s14, 3
      %s168 = smul.addr %s167, 8
      %s169 = smul.addr %s168, 8
      %s170 = scalar_lea.vmem %s3, %s169
      %v171 = vld [vmem:[%s1] sm:$0xff]
      %v172 = vld [vmem:[%s1 + $0x8] sm:$0xff]
      %v173 = vld [vmem:[%s1 + $0x10] sm:$0xff]
      %v174 = vld [vmem:[%s1 + $0x18] sm:$0xff]
      %v175 = vld [vmem:[%s1 + $0x20] sm:$0xff]
      %v176 = vld [vmem:[%s1 + $0x28] sm:$0xff]
      %v177 = vld [vmem:[%s1 + $0x30] sm:$0xff]
      %v178 = vld [vmem:[%s1 + $0x38] sm:$0xff]
      %v179 = vld [vmem:[%s1 + $0x40] sm:$0xff]
      %v180 = vld [vmem:[%s1 + $0x48] sm:$0xff]
      %v181 = vld [vmem:[%s1 + $0x50] sm:$0xff]
      %v182 = vld [vmem:[%s1 + $0x58] sm:$0xff]
      %v183 = vld [vmem:[%s1 + $0x60] sm:$0xff]
      %v184 = vld [vmem:[%s1 + $0x68] sm:$0xff]
      %v185 = vld [vmem:[%s1 + $0x70] sm:$0xff]
      %v186 = vld [vmem:[%s1 + $0x78] sm:$0xff]
      %v187 = vld [vmem:[%s1 + $0x80] sm:$0xff]
      %v188 = vld [vmem:[%s1 + $0x88] sm:$0xff]
      %v189 = vld [vmem:[%s1 + $0x90] sm:$0xff]
      %v190 = vld [vmem:[%s1 + $0x98] sm:$0xff]
      %v191 = vld [vmem:[%s1 + $0xa0] sm:$0xff]
      %v192 = vld [vmem:[%s2] sm:$0x1]
      %v193 = vld [vmem:[%s2 + $0x1] sm:$0x1]
      %v194 = vld [vmem:[%s2 + $0x2] sm:$0x1]
      %v195 = vld [vmem:[%s2 + $0x3] sm:$0x1]
      %v196 = vld [vmem:[%s2 + $0x4] sm:$0x1]
      %v197 = vld [vmem:[%s2 + $0x5] sm:$0xff]
      %v198 = vld [vmem:[%s2 + $0xd] sm:$0xff]
      %v199 = vld [vmem:[%s2 + $0x15] sm:$0x3]
      %vm200 = vcmask 130048
      %201 = vst.msk [vmem:[#allocation2] sm:$0xff] %vm200, 0.0
      %202 = vst.msk [vmem:[#allocation2 + $0x8] sm:$0xff] %vm200, 0.0
      %vm203 = vcmask 123904
      %204 = vst.msk [vmem:[#allocation2 + $0x10] sm:$0x3] %vm203, 0.0
      %s205 = scalar_lea.vmem [#allocation2], 408
      %206 = vst.msk [vmem:[%s205] sm:$0xff] %vm200, 0.0
      %207 = vst.msk [vmem:[%s205 + $0x8] sm:$0xff] %vm200, 0.0
      %208 = vst.msk [vmem:[%s205 + $0x10] sm:$0x3] %vm203, 0.0
      %vm209 = vcmask 122880
      %210 = vst.msk [vmem:[#allocation2] sm:$0x1] %vm209, 0.0
      %211 = vst.msk [vmem:[#allocation2 + $0x18] sm:$0x1] %vm209, 0.0
      %212 = vst.msk [vmem:[#allocation2 + $0x30] sm:$0x1] %vm209, 0.0
      %213 = vst.msk [vmem:[#allocation2 + $0x48] sm:$0x1] %vm209, 0.0
      %214 = vst.msk [vmem:[#allocation2 + $0x60] sm:$0x1] %vm209, 0.0
      %215 = vst.msk [vmem:[#allocation2 + $0x78] sm:$0x1] %vm209, 0.0
      %216 = vst.msk [vmem:[#allocation2 + $0x90] sm:$0x1] %vm209, 0.0
      %217 = vst.msk [vmem:[#allocation2 + $0xa8] sm:$0x1] %vm209, 0.0
      %218 = vst.msk [vmem:[#allocation2 + $0xc0] sm:$0x1] %vm209, 0.0
      %219 = vst.msk [vmem:[#allocation2 + $0xd8] sm:$0x1] %vm209, 0.0
      %220 = vst.msk [vmem:[#allocation2 + $0xf0] sm:$0x1] %vm209, 0.0
      %221 = vst.msk [vmem:[#allocation2 + $0x108] sm:$0x1] %vm209, 0.0
      %222 = vst.msk [vmem:[#allocation2 + $0x120] sm:$0x1] %vm209, 0.0
      %223 = vst.msk [vmem:[#allocation2 + $0x138] sm:$0x1] %vm209, 0.0
      %224 = vst.msk [vmem:[#allocation2 + $0x150] sm:$0x1] %vm209, 0.0
      %225 = vst.msk [vmem:[#allocation2 + $0x168] sm:$0x1] %vm209, 0.0
      %226 = vst.msk [vmem:[#allocation2 + $0x180] sm:$0x1] %vm209, 0.0
      %227 = vst.msk [vmem:[#allocation2 + $0x198] sm:$0x1] %vm209, 0.0
      %228 = vst.msk [vmem:[#allocation2 + $0x11] sm:$0x1] %vm209, 0.0
      %229 = vst.msk [vmem:[#allocation2 + $0x29] sm:$0x1] %vm209, 0.0
      %230 = vst.msk [vmem:[#allocation2 + $0x41] sm:$0x1] %vm209, 0.0
      %231 = vst.msk [vmem:[#allocation2 + $0x59] sm:$0x1] %vm209, 0.0
      %232 = vst.msk [vmem:[#allocation2 + $0x71] sm:$0x1] %vm209, 0.0
      %233 = vst.msk [vmem:[#allocation2 + $0x89] sm:$0x1] %vm209, 0.0
      %234 = vst.msk [vmem:[#allocation2 + $0xa1] sm:$0x1] %vm209, 0.0
      %235 = vst.msk [vmem:[#allocation2 + $0xb9] sm:$0x1] %vm209, 0.0
      %236 = vst.msk [vmem:[#allocation2 + $0xd1] sm:$0x1] %vm209, 0.0
      %237 = vst.msk [vmem:[#allocation2 + $0xe9] sm:$0x1] %vm209, 0.0
      %238 = vst.msk [vmem:[#allocation2 + $0x101] sm:$0x1] %vm209, 0.0
      %239 = vst.msk [vmem:[#allocation2 + $0x119] sm:$0x1] %vm209, 0.0
      %240 = vst.msk [vmem:[#allocation2 + $0x131] sm:$0x1] %vm209, 0.0
      %241 = vst.msk [vmem:[#allocation2 + $0x149] sm:$0x1] %vm209, 0.0
      %242 = vst.msk [vmem:[#allocation2 + $0x161] sm:$0x1] %vm209, 0.0
      %243 = vst.msk [vmem:[#allocation2 + $0x179] sm:$0x1] %vm209, 0.0
      %244 = vst.msk [vmem:[#allocation2 + $0x191] sm:$0x1] %vm209, 0.0
      %245 = vst.msk [vmem:[#allocation2 + $0x1a9] sm:$0x1] %vm209, 0.0
      %v246 = vld [vmem:[%s165] sm:$0xff]
      %v247 = vld [vmem:[%s165 + $0x8] sm:$0xff]
      %v248 = vld [vmem:[%s165 + $0x10] sm:$0xff]
      %v249 = vld [vmem:[%s165 + $0x18] sm:$0xff]
      %v250 = vld [vmem:[%s165 + $0x20] sm:$0xff]
      %v251 = vld [vmem:[%s165 + $0x28] sm:$0xff]
      %v252 = vld [vmem:[%s165 + $0x30] sm:$0xff]
      %v253 = vld [vmem:[%s165 + $0x38] sm:$0xff]
      %v254 = vld [vmem:[%s165 + $0x40] sm:$0xff]
      %v255 = vld [vmem:[%s165 + $0x48] sm:$0xff]
      %v256 = vld [vmem:[%s165 + $0x50] sm:$0xff]
      %v257 = vld [vmem:[%s165 + $0x58] sm:$0xff]
      %v258 = vld [vmem:[%s165 + $0x60] sm:$0xff]
      %v259 = vld [vmem:[%s165 + $0x68] sm:$0xff]
      %v260 = vld [vmem:[%s165 + $0x70] sm:$0xff]
      %v261 = vld [vmem:[%s165 + $0x78] sm:$0xff]
      %v262 = vld [vmem:[%s165 + $0x80] sm:$0xff]
      %v263 = vld [vmem:[%s165 + $0x88] sm:$0xff]
      %v264 = vld [vmem:[%s165 + $0x90] sm:$0xff]
      %v265 = vld [vmem:[%s165 + $0x98] sm:$0xff]
      %v266 = vld [vmem:[%s165 + $0xa0] sm:$0xff]
      %v267 = vld [vmem:[%s165 + $0xa8] sm:$0xff]
      %v268 = vld [vmem:[%s165 + $0xb0] sm:$0xff]
      %v269 = vld [vmem:[%s165 + $0xb8] sm:$0xff]
      %v270 = vld [vmem:[%s165 + $0xc0] sm:$0xff]
      %v271 = vld [vmem:[%s165 + $0xc8] sm:$0xff]
      %v272 = vld [vmem:[%s165 + $0xd0] sm:$0xff]
      %v273 = vld [vmem:[%s165 + $0xd8] sm:$0xff]
      %v274 = vld [vmem:[%s165 + $0xe0] sm:$0xff]
      %v275 = vld [vmem:[%s165 + $0xe8] sm:$0xff]
      %v276 = vld [vmem:[%s165 + $0xf0] sm:$0xff]
      %v277 = vld [vmem:[%s165 + $0xf8] sm:$0xff]
      %v278 = vperm.slane %v192, 0
      %vm279 = vcmask 64512
      %v281 = vsel %vm279, %v246, 0
      %v284 = vsel %vm279, %v247, 0
      %v287 = vsel %vm279, %v248, 0
      %v290 = vsel %vm279, %v249, 0
      %v293 = vsel %vm279, %v250, 0
      %v296 = vsel %vm279, %v251, 0
      %v299 = vsel %vm279, %v252, 0
      %v302 = vsel %vm279, %v253, 0
      %v305 = vsel %vm279, %v254, 0
      %v308 = vsel %vm279, %v255, 0
      %v311 = vsel %vm279, %v256, 0
      %v314 = vsel %vm279, %v257, 0
      %v317 = vsel %vm279, %v258, 0
      %v320 = vsel %vm279, %v259, 0
      %v323 = vsel %vm279, %v260, 0
      %v326 = vsel %vm279, %v261, 0
      %v329 = vsel %vm279, %v262, 0
      %v332 = vsel %vm279, %v263, 0
      %v335 = vsel %vm279, %v264, 0
      %v338 = vsel %vm279, %v265, 0
      %v341 = vsel %vm279, %v266, 0
      %v344 = vsel %vm279, %v267, 0
      %v347 = vsel %vm279, %v268, 0
      %v350 = vsel %vm279, %v269, 0
      %v353 = vsel %vm279, %v270, 0
      %v356 = vsel %vm279, %v271, 0
      %v359 = vsel %vm279, %v272, 0
      %v362 = vsel %vm279, %v273, 0
      %v365 = vsel %vm279, %v274, 0
      %v368 = vsel %vm279, %v275, 0
      %v371 = vsel %vm279, %v276, 0
      %v374 = vsel %vm279, %v277, 0
      %376 = vmatpush.msra.mxu0 0.0
      %377 = vmatpush.msra.mxu0 0.0
      %378 = vmatpush.msra.mxu0 0.0
      %379 = vmatpush.msra.mxu0 0.0
      %380 = vmatpush.msra.mxu0 0.0
      %381 = vmatpush.msra.mxu0 0.0
      %382 = vmatpush.msra.mxu0 0.0
      %383 = vmatpush.msra.mxu0 0.0
      %384 = vmatpush.msra.mxu0 0.0
      %385 = vmatpush.msra.mxu0 0.0
      %386 = vmatpush.msra.mxu0 0.0
      %387 = vmatpush.msra.mxu0 0.0
      %388 = vmatpush.msra.mxu0 0.0
      %389 = vmatpush.msra.mxu0 0.0
      %390 = vmatpush.msra.mxu0 0.0
      %391 = vmatpush.msra.mxu0 %v171
      %392 = vmatmul.f32.gmra.mxu0 %v281
      %v393 = vpop.f32.mrf.mxu0
      %v394 = vadd.f32 %v278, %v393
      %395 = vmatmul.f32.gmra.mxu0 %v284
      %v396 = vpop.f32.mrf.mxu0
      %v397 = vadd.f32 %v278, %v396
      %398 = vmatmul.f32.gmra.mxu0 %v287
      %v399 = vpop.f32.mrf.mxu0
      %v400 = vadd.f32 %v278, %v399
      %401 = vmatmul.f32.gmra.mxu0 %v290
      %v402 = vpop.f32.mrf.mxu0
      %v403 = vadd.f32 %v278, %v402
      %404 = vmatmul.f32.gmra.mxu0 %v293
      %v405 = vpop.f32.mrf.mxu0
      %v406 = vadd.f32 %v278, %v405
      %407 = vmatmul.f32.gmra.mxu0 %v296
      %v408 = vpop.f32.mrf.mxu0
      %v409 = vadd.f32 %v278, %v408
      %410 = vmatmul.f32.gmra.mxu0 %v299
      %v411 = vpop.f32.mrf.mxu0
      %v412 = vadd.f32 %v278, %v411
      %413 = vmatmul.f32.gmra.mxu0 %v302
      %v414 = vpop.f32.mrf.mxu0
      %v415 = vadd.f32 %v278, %v414
      %416 = vmatmul.f32.gmra.mxu0 %v305
      %v417 = vpop.f32.mrf.mxu0
      %v418 = vadd.f32 %v278, %v417
      %419 = vmatmul.f32.gmra.mxu0 %v308
      %v420 = vpop.f32.mrf.mxu0
      %v421 = vadd.f32 %v278, %v420
      %422 = vmatmul.f32.gmra.mxu0 %v311
      %v423 = vpop.f32.mrf.mxu0
      %v424 = vadd.f32 %v278, %v423
      %425 = vmatmul.f32.gmra.mxu0 %v314
      %v426 = vpop.f32.mrf.mxu0
      %v427 = vadd.f32 %v278, %v426
      %428 = vmatmul.f32.gmra.mxu0 %v317
      %v429 = vpop.f32.mrf.mxu0
      %v430 = vadd.f32 %v278, %v429
      %431 = vmatmul.f32.gmra.mxu0 %v320
      %v432 = vpop.f32.mrf.mxu0
      %v433 = vadd.f32 %v278, %v432
      %434 = vmatmul.f32.gmra.mxu0 %v323
      %v435 = vpop.f32.mrf.mxu0
      %v436 = vadd.f32 %v278, %v435
      %437 = vmatmul.f32.gmra.mxu0 %v326
      %v438 = vpop.f32.mrf.mxu0
      %v439 = vadd.f32 %v278, %v438
      %440 = vmatmul.f32.gmra.mxu0 %v329
      %v441 = vpop.f32.mrf.mxu0
      %v442 = vadd.f32 %v278, %v441
      %443 = vmatmul.f32.gmra.mxu0 %v332
      %v444 = vpop.f32.mrf.mxu0
      %v445 = vadd.f32 %v278, %v444
      %446 = vmatmul.f32.gmra.mxu0 %v335
      %v447 = vpop.f32.mrf.mxu0
      %v448 = vadd.f32 %v278, %v447
      %449 = vmatmul.f32.gmra.mxu0 %v338
      %v450 = vpop.f32.mrf.mxu0
      %v451 = vadd.f32 %v278, %v450
      %452 = vmatmul.f32.gmra.mxu0 %v341
      %v453 = vpop.f32.mrf.mxu0
      %v454 = vadd.f32 %v278, %v453
      %455 = vmatmul.f32.gmra.mxu0 %v344
      %v456 = vpop.f32.mrf.mxu0
      %v457 = vadd.f32 %v278, %v456
      %458 = vmatmul.f32.gmra.mxu0 %v347
      %v459 = vpop.f32.mrf.mxu0
      %v460 = vadd.f32 %v278, %v459
      %461 = vmatmul.f32.gmra.mxu0 %v350
      %v462 = vpop.f32.mrf.mxu0
      %v463 = vadd.f32 %v278, %v462
      %464 = vmatmul.f32.gmra.mxu0 %v353
      %v465 = vpop.f32.mrf.mxu0
      %v466 = vadd.f32 %v278, %v465
      %467 = vmatmul.f32.gmra.mxu0 %v356
      %v468 = vpop.f32.mrf.mxu0
      %v469 = vadd.f32 %v278, %v468
      %470 = vmatmul.f32.gmra.mxu0 %v359
      %v471 = vpop.f32.mrf.mxu0
      %v472 = vadd.f32 %v278, %v471
      %473 = vmatmul.f32.gmra.mxu0 %v362
      %v474 = vpop.f32.mrf.mxu0
      %v475 = vadd.f32 %v278, %v474
      %476 = vmatmul.f32.gmra.mxu0 %v365
      %v477 = vpop.f32.mrf.mxu0
      %v478 = vadd.f32 %v278, %v477
      %479 = vmatmul.f32.gmra.mxu0 %v368
      %v480 = vpop.f32.mrf.mxu0
      %v481 = vadd.f32 %v278, %v480
      %482 = vmatmul.f32.gmra.mxu0 %v371
      %v483 = vpop.f32.mrf.mxu0
      %v484 = vadd.f32 %v278, %v483
      %485 = vmatmul.f32.gmra.mxu0 %v374
      %v486 = vpop.f32.mrf.mxu0
      %v487 = vadd.f32 %v278, %v486
      %488 = vdwg.mxu0
      %v489 = vmax.f32 %v394, 0.0
      %v490 = vmax.f32 %v397, 0.0
      %v491 = vmax.f32 %v400, 0.0
      %v492 = vmax.f32 %v403, 0.0
      %v493 = vmax.f32 %v406, 0.0
      %v494 = vmax.f32 %v409, 0.0
      %v495 = vmax.f32 %v412, 0.0
      %v496 = vmax.f32 %v415, 0.0
      %v497 = vmax.f32 %v418, 0.0
      %v498 = vmax.f32 %v421, 0.0
      %v499 = vmax.f32 %v424, 0.0
      %v500 = vmax.f32 %v427, 0.0
      %v501 = vmax.f32 %v430, 0.0
      %v502 = vmax.f32 %v433, 0.0
      %v503 = vmax.f32 %v436, 0.0
      %v504 = vmax.f32 %v439, 0.0
      %v505 = vmax.f32 %v442, 0.0
      %v506 = vmax.f32 %v445, 0.0
      %v507 = vmax.f32 %v448, 0.0
      %v508 = vmax.f32 %v451, 0.0
      %v509 = vmax.f32 %v454, 0.0
      %v510 = vmax.f32 %v457, 0.0
      %v511 = vmax.f32 %v460, 0.0
      %v512 = vmax.f32 %v463, 0.0
      %v513 = vmax.f32 %v466, 0.0
      %v514 = vmax.f32 %v469, 0.0
      %v515 = vmax.f32 %v472, 0.0
      %v516 = vmax.f32 %v475, 0.0
      %v517 = vmax.f32 %v478, 0.0
      %v518 = vmax.f32 %v481, 0.0
      %v519 = vmax.f32 %v484, 0.0
      %v520 = vmax.f32 %v487, 0.0
      %s521 = scalar_lea.vmem [#allocation2], 24
      %522 = vst.msk [vmem:[%s521 + $0x1] sm:$0xff] %vm200, %v489
      %523 = vst.msk [vmem:[%s521 + $0x9] sm:$0xff] %vm200, %v490
      %524 = vst.msk [vmem:[%s521 + $0x19] sm:$0xff] %vm200, %v491
      %525 = vst.msk [vmem:[%s521 + $0x21] sm:$0xff] %vm200, %v492
      %526 = vst.msk [vmem:[%s521 + $0x31] sm:$0xff] %vm200, %v493
      %527 = vst.msk [vmem:[%s521 + $0x39] sm:$0xff] %vm200, %v494
      %528 = vst.msk [vmem:[%s521 + $0x49] sm:$0xff] %vm200, %v495
      %529 = vst.msk [vmem:[%s521 + $0x51] sm:$0xff] %vm200, %v496
      %530 = vst.msk [vmem:[%s521 + $0x61] sm:$0xff] %vm200, %v497
      %531 = vst.msk [vmem:[%s521 + $0x69] sm:$0xff] %vm200, %v498
      %532 = vst.msk [vmem:[%s521 + $0x79] sm:$0xff] %vm200, %v499
      %533 = vst.msk [vmem:[%s521 + $0x81] sm:$0xff] %vm200, %v500
      %534 = vst.msk [vmem:[%s521 + $0x91] sm:$0xff] %vm200, %v501
      %535 = vst.msk [vmem:[%s521 + $0x99] sm:$0xff] %vm200, %v502
      %536 = vst.msk [vmem:[%s521 + $0xa9] sm:$0xff] %vm200, %v503
      %537 = vst.msk [vmem:[%s521 + $0xb1] sm:$0xff] %vm200, %v504
      %538 = vst.msk [vmem:[%s521 + $0xc1] sm:$0xff] %vm200, %v505
      %539 = vst.msk [vmem:[%s521 + $0xc9] sm:$0xff] %vm200, %v506
      %540 = vst.msk [vmem:[%s521 + $0xd9] sm:$0xff] %vm200, %v507
      %541 = vst.msk [vmem:[%s521 + $0xe1] sm:$0xff] %vm200, %v508
      %542 = vst.msk [vmem:[%s521 + $0xf1] sm:$0xff] %vm200, %v509
      %543 = vst.msk [vmem:[%s521 + $0xf9] sm:$0xff] %vm200, %v510
      %544 = vst.msk [vmem:[%s521 + $0x109] sm:$0xff] %vm200, %v511
      %545 = vst.msk [vmem:[%s521 + $0x111] sm:$0xff] %vm200, %v512
      %546 = vst.msk [vmem:[%s521 + $0x121] sm:$0xff] %vm200, %v513
      %547 = vst.msk [vmem:[%s521 + $0x129] sm:$0xff] %vm200, %v514
      %548 = vst.msk [vmem:[%s521 + $0x139] sm:$0xff] %vm200, %v515
      %549 = vst.msk [vmem:[%s521 + $0x141] sm:$0xff] %vm200, %v516
      %550 = vst.msk [vmem:[%s521 + $0x151] sm:$0xff] %vm200, %v517
      %551 = vst.msk [vmem:[%s521 + $0x159] sm:$0xff] %vm200, %v518
      %552 = vst.msk [vmem:[%s521 + $0x169] sm:$0xff] %vm200, %v519
      %553 = vst.msk [vmem:[%s521 + $0x171] sm:$0xff] %vm200, %v520
      %v554 = vld [vmem:[#allocation2] ss:$2 sm:$0xff]
      %s555 = scalar_lea.vmem [#allocation2], 48
      %v556 = vld [vmem:[%s555] ss:$2 sm:$0xff]
      %s557 = scalar_lea.vmem [#allocation2], 96
      %v558 = vld [vmem:[%s557] ss:$2 sm:$0xff]
      %s559 = scalar_lea.vmem [#allocation2], 144
      %v560 = vld [vmem:[%s559] ss:$2 sm:$0xff]
      %s561 = scalar_lea.vmem [#allocation2], 192
      %v562 = vld [vmem:[%s561] ss:$2 sm:$0xff]
      %s563 = scalar_lea.vmem [#allocation2], 240
      %v564 = vld [vmem:[%s563] ss:$2 sm:$0xff]
      %s565 = scalar_lea.vmem [#allocation2], 288
      %v566 = vld [vmem:[%s565] ss:$2 sm:$0xff]
      %s567 = scalar_lea.vmem [#allocation2], 336
      %v568 = vld [vmem:[%s567] ss:$2 sm:$0xff]
      %569 = vst.msk [vmem:[#allocation3] sm:$0xff] %vm200, %v554
      %570 = vst.msk [vmem:[#allocation3 + $0x10] sm:$0xff] %vm200, %v556
      %571 = vst.msk [vmem:[#allocation3 + $0x20] sm:$0xff] %vm200, %v558
      %572 = vst.msk [vmem:[#allocation3 + $0x30] sm:$0xff] %vm200, %v560
      %573 = vst.msk [vmem:[#allocation3 + $0x40] sm:$0xff] %vm200, %v562
      %574 = vst.msk [vmem:[#allocation3 + $0x50] sm:$0xff] %vm200, %v564
      %575 = vst.msk [vmem:[#allocation3 + $0x60] sm:$0xff] %vm200, %v566
      %576 = vst.msk [vmem:[#allocation3 + $0x70] sm:$0xff] %vm200, %v568
      %s577 = scalar_lea.vmem [#allocation2], 1
      %v578 = vld [vmem:[%s577] ss:$2 sm:$0xff]
      %s579 = scalar_lea.vmem [#allocation2], 49
      %v580 = vld [vmem:[%s579] ss:$2 sm:$0xff]
      %s581 = scalar_lea.vmem [#allocation2], 97
      %v582 = vld [vmem:[%s581] ss:$2 sm:$0xff]
      %s583 = scalar_lea.vmem [#allocation2], 145
      %v584 = vld [vmem:[%s583] ss:$2 sm:$0xff]
      %s585 = scalar_lea.vmem [#allocation2], 193
      %v586 = vld [vmem:[%s585] ss:$2 sm:$0xff]
      %s587 = scalar_lea.vmem [#allocation2], 241
      %v588 = vld [vmem:[%s587] ss:$2 sm:$0xff]
      %s589 = scalar_lea.vmem [#allocation2], 289
      %v590 = vld [vmem:[%s589] ss:$2 sm:$0xff]
      %s591 = scalar_lea.vmem [#allocation2], 337
      %v592 = vld [vmem:[%s591] ss:$2 sm:$0xff]
      %601 = vrot.lane.b32.xlu0 %v578, 16
      %v602 = vpop.permute.xlu0 %601
      %603 = vrot.lane.b32.xlu0 %v580, 16
      %v604 = vpop.permute.xlu0 %603
      %605 = vrot.lane.b32.xlu0 %v582, 16
      %v606 = vpop.permute.xlu0 %605
      %607 = vrot.lane.b32.xlu0 %v584, 16
      %v608 = vpop.permute.xlu0 %607
      %609 = vrot.lane.b32.xlu0 %v586, 16
      %v610 = vpop.permute.xlu0 %609
      %611 = vrot.lane.b32.xlu0 %v588, 16
      %v612 = vpop.permute.xlu0 %611
      %613 = vrot.lane.b32.xlu0 %v590, 16
      %v614 = vpop.permute.xlu0 %613
      %615 = vrot.lane.b32.xlu0 %v592, 16
      %v616 = vpop.permute.xlu0 %615
      %vm625 = vcmask 261248
      %626 = vst.msk [vmem:[#allocation3] sm:$0xff] %vm625, %v602
      %627 = vst.msk [vmem:[#allocation3 + $0x10] sm:$0xff] %vm625, %v604
      %628 = vst.msk [vmem:[#allocation3 + $0x20] sm:$0xff] %vm625, %v606
      %629 = vst.msk [vmem:[#allocation3 + $0x30] sm:$0xff] %vm625, %v608
      %630 = vst.msk [vmem:[#allocation3 + $0x40] sm:$0xff] %vm625, %v610
      %631 = vst.msk [vmem:[#allocation3 + $0x50] sm:$0xff] %vm625, %v612
      %632 = vst.msk [vmem:[#allocation3 + $0x60] sm:$0xff] %vm625, %v614
      %633 = vst.msk [vmem:[#allocation3 + $0x70] sm:$0xff] %vm625, %v616
      %s634 = scalar_lea.vmem [#allocation2], 2
      %v635 = vld [vmem:[%s634] ss:$2 sm:$0xff]
      %s636 = scalar_lea.vmem [#allocation2], 50
      %v637 = vld [vmem:[%s636] ss:$2 sm:$0xff]
      %s638 = scalar_lea.vmem [#allocation2], 98
      %v639 = vld [vmem:[%s638] ss:$2 sm:$0xff]
      %s640 = scalar_lea.vmem [#allocation2], 146
      %v641 = vld [vmem:[%s640] ss:$2 sm:$0xff]
      %s642 = scalar_lea.vmem [#allocation2], 194
      %v643 = vld [vmem:[%s642] ss:$2 sm:$0xff]
      %s644 = scalar_lea.vmem [#allocation2], 242
      %v645 = vld [vmem:[%s644] ss:$2 sm:$0xff]
      %s646 = scalar_lea.vmem [#allocation2], 290
      %v647 = vld [vmem:[%s646] ss:$2 sm:$0xff]
      %s648 = scalar_lea.vmem [#allocation2], 338
      %v649 = vld [vmem:[%s648] ss:$2 sm:$0xff]
      %658 = vrot.lane.b32.xlu0 %v635, 32
      %v659 = vpop.permute.xlu0 %658
      %660 = vrot.lane.b32.xlu0 %v637, 32
      %v661 = vpop.permute.xlu0 %660
      %662 = vrot.lane.b32.xlu0 %v639, 32
      %v663 = vpop.permute.xlu0 %662
      %664 = vrot.lane.b32.xlu0 %v641, 32
      %v665 = vpop.permute.xlu0 %664
      %666 = vrot.lane.b32.xlu0 %v643, 32
      %v667 = vpop.permute.xlu0 %666
      %668 = vrot.lane.b32.xlu0 %v645, 32
      %v669 = vpop.permute.xlu0 %668
      %670 = vrot.lane.b32.xlu0 %v647, 32
      %v671 = vpop.permute.xlu0 %670
      %672 = vrot.lane.b32.xlu0 %v649, 32
      %v673 = vpop.permute.xlu0 %672
      %vm682 = vcmask 392448
      %683 = vst.msk [vmem:[#allocation3] sm:$0xff] %vm682, %v659
      %684 = vst.msk [vmem:[#allocation3 + $0x10] sm:$0xff] %vm682, %v661
      %685 = vst.msk [vmem:[#allocation3 + $0x20] sm:$0xff] %vm682, %v663
      %686 = vst.msk [vmem:[#allocation3 + $0x30] sm:$0xff] %vm682, %v665
      %687 = vst.msk [vmem:[#allocation3 + $0x40] sm:$0xff] %vm682, %v667
      %688 = vst.msk [vmem:[#allocation3 + $0x50] sm:$0xff] %vm682, %v669
      %689 = vst.msk [vmem:[#allocation3 + $0x60] sm:$0xff] %vm682, %v671
      %690 = vst.msk [vmem:[#allocation3 + $0x70] sm:$0xff] %vm682, %v673
      %v691 = vld [vmem:[%s521] ss:$2 sm:$0xff]
      %s692 = scalar_lea.vmem %s521, 48 [#allocation2]
      %v693 = vld [vmem:[%s692] ss:$2 sm:$0xff]
      %s694 = scalar_lea.vmem %s521, 96 [#allocation2]
      %v695 = vld [vmem:[%s694] ss:$2 sm:$0xff]
      %s696 = scalar_lea.vmem %s521, 144 [#allocation2]
      %v697 = vld [vmem:[%s696] ss:$2 sm:$0xff]
      %s698 = scalar_lea.vmem %s521, 192 [#allocation2]
      %v699 = vld [vmem:[%s698] ss:$2 sm:$0xff]
      %s700 = scalar_lea.vmem %s521, 240 [#allocation2]
      %v701 = vld [vmem:[%s700] ss:$2 sm:$0xff]
      %s702 = scalar_lea.vmem %s521, 288 [#allocation2]
      %v703 = vld [vmem:[%s702] ss:$2 sm:$0xff]
      %s704 = scalar_lea.vmem %s521, 336 [#allocation2]
      %v705 = vld [vmem:[%s704] ss:$2 sm:$0xff]
      %714 = vrot.lane.b32.xlu0 %v691, 48
      %v715 = vpop.permute.xlu0 %714
      %716 = vrot.lane.b32.xlu0 %v693, 48
      %v717 = vpop.permute.xlu0 %716
      %718 = vrot.lane.b32.xlu0 %v695, 48
      %v719 = vpop.permute.xlu0 %718
      %720 = vrot.lane.b32.xlu0 %v697, 48
      %v721 = vpop.permute.xlu0 %720
      %722 = vrot.lane.b32.xlu0 %v699, 48
      %v723 = vpop.permute.xlu0 %722
      %724 = vrot.lane.b32.xlu0 %v701, 48
      %v725 = vpop.permute.xlu0 %724
      %726 = vrot.lane.b32.xlu0 %v703, 48
      %v727 = vpop.permute.xlu0 %726
      %728 = vrot.lane.b32.xlu0 %v705, 48
      %v729 = vpop.permute.xlu0 %728
      %vm738 = vcmask 523648
      %739 = vst.msk [vmem:[#allocation3] sm:$0xff] %vm738, %v715
      %740 = vst.msk [vmem:[#allocation3 + $0x10] sm:$0xff] %vm738, %v717
      %741 = vst.msk [vmem:[#allocation3 + $0x20] sm:$0xff] %vm738, %v719
      %742 = vst.msk [vmem:[#allocation3 + $0x30] sm:$0xff] %vm738, %v721
      %743 = vst.msk [vmem:[#allocation3 + $0x40] sm:$0xff] %vm738, %v723
      %744 = vst.msk [vmem:[#allocation3 + $0x50] sm:$0xff] %vm738, %v725
      %745 = vst.msk [vmem:[#allocation3 + $0x60] sm:$0xff] %vm738, %v727
      %746 = vst.msk [vmem:[#allocation3 + $0x70] sm:$0xff] %vm738, %v729
      %s747 = scalar_lea.vmem %s521, 1 [#allocation2]
      %v748 = vld [vmem:[%s747] ss:$2 sm:$0xff]
      %s749 = scalar_lea.vmem %s521, 49 [#allocation2]
      %v750 = vld [vmem:[%s749] ss:$2 sm:$0xff]
      %s751 = scalar_lea.vmem %s521, 97 [#allocation2]
      %v752 = vld [vmem:[%s751] ss:$2 sm:$0xff]
      %s753 = scalar_lea.vmem %s521, 145 [#allocation2]
      %v754 = vld [vmem:[%s753] ss:$2 sm:$0xff]
      %s755 = scalar_lea.vmem %s521, 193 [#allocation2]
      %v756 = vld [vmem:[%s755] ss:$2 sm:$0xff]
      %s757 = scalar_lea.vmem %s521, 241 [#allocation2]
      %v758 = vld [vmem:[%s757] ss:$2 sm:$0xff]
      %s759 = scalar_lea.vmem %s521, 289 [#allocation2]
      %v760 = vld [vmem:[%s759] ss:$2 sm:$0xff]
      %s761 = scalar_lea.vmem %s521, 337 [#allocation2]
      %v762 = vld [vmem:[%s761] ss:$2 sm:$0xff]
      %771 = vrot.lane.b32.xlu0 %v748, 64
      %v772 = vpop.permute.xlu0 %771
      %773 = vrot.lane.b32.xlu0 %v750, 64
      %v774 = vpop.permute.xlu0 %773
      %775 = vrot.lane.b32.xlu0 %v752, 64
      %v776 = vpop.permute.xlu0 %775
      %777 = vrot.lane.b32.xlu0 %v754, 64
      %v778 = vpop.permute.xlu0 %777
      %779 = vrot.lane.b32.xlu0 %v756, 64
      %v780 = vpop.permute.xlu0 %779
      %781 = vrot.lane.b32.xlu0 %v758, 64
      %v782 = vpop.permute.xlu0 %781
      %783 = vrot.lane.b32.xlu0 %v760, 64
      %v784 = vpop.permute.xlu0 %783
      %785 = vrot.lane.b32.xlu0 %v762, 64
      %v786 = vpop.permute.xlu0 %785
      %vm795 = vcmask 654848
      %796 = vst.msk [vmem:[#allocation3] sm:$0xff] %vm795, %v772
      %797 = vst.msk [vmem:[#allocation3 + $0x10] sm:$0xff] %vm795, %v774
      %798 = vst.msk [vmem:[#allocation3 + $0x20] sm:$0xff] %vm795, %v776
      %799 = vst.msk [vmem:[#allocation3 + $0x30] sm:$0xff] %vm795, %v778
      %800 = vst.msk [vmem:[#allocation3 + $0x40] sm:$0xff] %vm795, %v780
      %801 = vst.msk [vmem:[#allocation3 + $0x50] sm:$0xff] %vm795, %v782
      %802 = vst.msk [vmem:[#allocation3 + $0x60] sm:$0xff] %vm795, %v784
      %803 = vst.msk [vmem:[#allocation3 + $0x70] sm:$0xff] %vm795, %v786
      %s804 = scalar_lea.vmem %s521, 2 [#allocation2]
      %v805 = vld [vmem:[%s804] ss:$2 sm:$0xff]
      %s806 = scalar_lea.vmem %s521, 50 [#allocation2]
      %v807 = vld [vmem:[%s806] ss:$2 sm:$0xff]
      %s808 = scalar_lea.vmem %s521, 98 [#allocation2]
      %v809 = vld [vmem:[%s808] ss:$2 sm:$0xff]
      %s810 = scalar_lea.vmem %s521, 146 [#allocation2]
      %v811 = vld [vmem:[%s810] ss:$2 sm:$0xff]
      %s812 = scalar_lea.vmem %s521, 194 [#allocation2]
      %v813 = vld [vmem:[%s812] ss:$2 sm:$0xff]
      %s814 = scalar_lea.vmem %s521, 242 [#allocation2]
      %v815 = vld [vmem:[%s814] ss:$2 sm:$0xff]
      %s816 = scalar_lea.vmem %s521, 290 [#allocation2]
      %v817 = vld [vmem:[%s816] ss:$2 sm:$0xff]
      %s818 = scalar_lea.vmem %s521, 338 [#allocation2]
      %v819 = vld [vmem:[%s818] ss:$2 sm:$0xff]
      %828 = vrot.lane.b32.xlu0 %v805, 80
      %v829 = vpop.permute.xlu0 %828
      %830 = vrot.lane.b32.xlu0 %v807, 80
      %v831 = vpop.permute.xlu0 %830
      %832 = vrot.lane.b32.xlu0 %v809, 80
      %v833 = vpop.permute.xlu0 %832
      %834 = vrot.lane.b32.xlu0 %v811, 80
      %v835 = vpop.permute.xlu0 %834
      %836 = vrot.lane.b32.xlu0 %v813, 80
      %v837 = vpop.permute.xlu0 %836
      %838 = vrot.lane.b32.xlu0 %v815, 80
      %v839 = vpop.permute.xlu0 %838
      %840 = vrot.lane.b32.xlu0 %v817, 80
      %v841 = vpop.permute.xlu0 %840
      %842 = vrot.lane.b32.xlu0 %v819, 80
      %v843 = vpop.permute.xlu0 %842
      %vm852 = vcmask 786048
      %853 = vst.msk [vmem:[#allocation3] sm:$0xff] %vm852, %v829
      %854 = vst.msk [vmem:[#allocation3 + $0x10] sm:$0xff] %vm852, %v831
      %855 = vst.msk [vmem:[#allocation3 + $0x20] sm:$0xff] %vm852, %v833
      %856 = vst.msk [vmem:[#allocation3 + $0x30] sm:$0xff] %vm852, %v835
      %857 = vst.msk [vmem:[#allocation3 + $0x40] sm:$0xff] %vm852, %v837
      %858 = vst.msk [vmem:[#allocation3 + $0x50] sm:$0xff] %vm852, %v839
      %859 = vst.msk [vmem:[#allocation3 + $0x60] sm:$0xff] %vm852, %v841
      %860 = vst.msk [vmem:[#allocation3 + $0x70] sm:$0xff] %vm852, %v843
      %s861 = scalar_lea.vmem [#allocation2], 48
      %v862 = vld [vmem:[%s861] ss:$2 sm:$0xff]
      %s863 = scalar_lea.vmem %s861, 48 [#allocation2]
      %v864 = vld [vmem:[%s863] ss:$2 sm:$0xff]
      %s865 = scalar_lea.vmem %s861, 96 [#allocation2]
      %v866 = vld [vmem:[%s865] ss:$2 sm:$0xff]
      %s867 = scalar_lea.vmem %s861, 144 [#allocation2]
      %v868 = vld [vmem:[%s867] ss:$2 sm:$0xff]
      %s869 = scalar_lea.vmem %s861, 192 [#allocation2]
      %v870 = vld [vmem:[%s869] ss:$2 sm:$0xff]
      %s871 = scalar_lea.vmem %s861, 240 [#allocation2]
      %v872 = vld [vmem:[%s871] ss:$2 sm:$0xff]
      %s873 = scalar_lea.vmem %s861, 288 [#allocation2]
      %v874 = vld [vmem:[%s873] ss:$2 sm:$0xff]
      %s875 = scalar_lea.vmem %s861, 336 [#allocation2]
      %v876 = vld [vmem:[%s875] ss:$2 sm:$0xff]
      %885 = vrot.lane.b32.xlu0 %v862, 96
      %v886 = vpop.permute.xlu0 %885
      %887 = vrot.lane.b32.xlu0 %v864, 96
      %v888 = vpop.permute.xlu0 %887
      %889 = vrot.lane.b32.xlu0 %v866, 96
      %v890 = vpop.permute.xlu0 %889
      %891 = vrot.lane.b32.xlu0 %v868, 96
      %v892 = vpop.permute.xlu0 %891
      %893 = vrot.lane.b32.xlu0 %v870, 96
      %v894 = vpop.permute.xlu0 %893
      %895 = vrot.lane.b32.xlu0 %v872, 96
      %v896 = vpop.permute.xlu0 %895
      %897 = vrot.lane.b32.xlu0 %v874, 96
      %v898 = vpop.permute.xlu0 %897
      %899 = vrot.lane.b32.xlu0 %v876, 96
      %v900 = vpop.permute.xlu0 %899
      %vm909 = vcmask 917248
      %910 = vst.msk [vmem:[#allocation3] sm:$0xff] %vm909, %v886
      %911 = vst.msk [vmem:[#allocation3 + $0x10] sm:$0xff] %vm909, %v888
      %912 = vst.msk [vmem:[#allocation3 + $0x20] sm:$0xff] %vm909, %v890
      %913 = vst.msk [vmem:[#allocation3 + $0x30] sm:$0xff] %vm909, %v892
      %914 = vst.msk [vmem:[#allocation3 + $0x40] sm:$0xff] %vm909, %v894
      %915 = vst.msk [vmem:[#allocation3 + $0x50] sm:$0xff] %vm909, %v896
      %916 = vst.msk [vmem:[#allocation3 + $0x60] sm:$0xff] %vm909, %v898
      %917 = vst.msk [vmem:[#allocation3 + $0x70] sm:$0xff] %vm909, %v900
      %s918 = scalar_lea.vmem %s861, 1 [#allocation2]
      %v919 = vld [vmem:[%s918] ss:$2 sm:$0xff]
      %s920 = scalar_lea.vmem %s861, 49 [#allocation2]
      %v921 = vld [vmem:[%s920] ss:$2 sm:$0xff]
      %s922 = scalar_lea.vmem %s861, 97 [#allocation2]
      %v923 = vld [vmem:[%s922] ss:$2 sm:$0xff]
      %s924 = scalar_lea.vmem %s861, 145 [#allocation2]
      %v925 = vld [vmem:[%s924] ss:$2 sm:$0xff]
      %s926 = scalar_lea.vmem %s861, 193 [#allocation2]
      %v927 = vld [vmem:[%s926] ss:$2 sm:$0xff]
      %s928 = scalar_lea.vmem %s861, 241 [#allocation2]
      %v929 = vld [vmem:[%s928] ss:$2 sm:$0xff]
      %s930 = scalar_lea.vmem %s861, 289 [#allocation2]
      %v931 = vld [vmem:[%s930] ss:$2 sm:$0xff]
      %s932 = scalar_lea.vmem %s861, 337 [#allocation2]
      %v933 = vld [vmem:[%s932] ss:$2 sm:$0xff]
      %942 = vrot.lane.b32.xlu0 %v919, 112
      %v943 = vpop.permute.xlu0 %942
      %944 = vrot.lane.b32.xlu0 %v921, 112
      %v945 = vpop.permute.xlu0 %944
      %946 = vrot.lane.b32.xlu0 %v923, 112
      %v947 = vpop.permute.xlu0 %946
      %948 = vrot.lane.b32.xlu0 %v925, 112
      %v949 = vpop.permute.xlu0 %948
      %950 = vrot.lane.b32.xlu0 %v927, 112
      %v951 = vpop.permute.xlu0 %950
      %952 = vrot.lane.b32.xlu0 %v929, 112
      %v953 = vpop.permute.xlu0 %952
      %954 = vrot.lane.b32.xlu0 %v931, 112
      %v955 = vpop.permute.xlu0 %954
      %956 = vrot.lane.b32.xlu0 %v933, 112
      %v957 = vpop.permute.xlu0 %956
      %vm966 = vcmask 1048448
      %967 = vst.msk [vmem:[#allocation3] sm:$0xff] %vm966, %v943
      %968 = vst.msk [vmem:[#allocation3 + $0x10] sm:$0xff] %vm966, %v945
      %969 = vst.msk [vmem:[#allocation3 + $0x20] sm:$0xff] %vm966, %v947
      %970 = vst.msk [vmem:[#allocation3 + $0x30] sm:$0xff] %vm966, %v949
      %971 = vst.msk [vmem:[#allocation3 + $0x40] sm:$0xff] %vm966, %v951
      %972 = vst.msk [vmem:[#allocation3 + $0x50] sm:$0xff] %vm966, %v953
      %973 = vst.msk [vmem:[#allocation3 + $0x60] sm:$0xff] %vm966, %v955
      %974 = vst.msk [vmem:[#allocation3 + $0x70] sm:$0xff] %vm966, %v957
      %s975 = scalar_lea.vmem %s861, 2 [#allocation2]
      %v976 = vld [vmem:[%s975] ss:$2 sm:$0xff]
      %s977 = scalar_lea.vmem %s861, 50 [#allocation2]
      %v978 = vld [vmem:[%s977] ss:$2 sm:$0xff]
      %s979 = scalar_lea.vmem %s861, 98 [#allocation2]
      %v980 = vld [vmem:[%s979] ss:$2 sm:$0xff]
      %s981 = scalar_lea.vmem %s861, 146 [#allocation2]
      %v982 = vld [vmem:[%s981] ss:$2 sm:$0xff]
      %s983 = scalar_lea.vmem %s861, 194 [#allocation2]
      %v984 = vld [vmem:[%s983] ss:$2 sm:$0xff]
      %s985 = scalar_lea.vmem %s861, 242 [#allocation2]
      %v986 = vld [vmem:[%s985] ss:$2 sm:$0xff]
      %s987 = scalar_lea.vmem %s861, 290 [#allocation2]
      %v988 = vld [vmem:[%s987] ss:$2 sm:$0xff]
      %s989 = scalar_lea.vmem %s861, 338 [#allocation2]
      %v990 = vld [vmem:[%s989] ss:$2 sm:$0xff]
      %991 = vst.msk [vmem:[#allocation3 + $0x8] sm:$0xff] %vm200, %v976
      %992 = vst.msk [vmem:[#allocation3 + $0x18] sm:$0xff] %vm200, %v978
      %993 = vst.msk [vmem:[#allocation3 + $0x28] sm:$0xff] %vm200, %v980
      %994 = vst.msk [vmem:[#allocation3 + $0x38] sm:$0xff] %vm200, %v982
      %995 = vst.msk [vmem:[#allocation3 + $0x48] sm:$0xff] %vm200, %v984
      %996 = vst.msk [vmem:[#allocation3 + $0x58] sm:$0xff] %vm200, %v986
      %997 = vst.msk [vmem:[#allocation3 + $0x68] sm:$0xff] %vm200, %v988
      %998 = vst.msk [vmem:[#allocation3 + $0x78] sm:$0xff] %vm200, %v990
      %v999 = vld [vmem:[#allocation3] sm:$0xff]
      %v1000 = vld [vmem:[#allocation3 + $0x8] sm:$0xff]
      %v1001 = vld [vmem:[#allocation3 + $0x10] sm:$0xff]
      %v1002 = vld [vmem:[#allocation3 + $0x18] sm:$0xff]
      %v1003 = vld [vmem:[#allocation3 + $0x20] sm:$0xff]
      %v1004 = vld [vmem:[#allocation3 + $0x28] sm:$0xff]
      %v1005 = vld [vmem:[#allocation3 + $0x30] sm:$0xff]
      %v1006 = vld [vmem:[#allocation3 + $0x38] sm:$0xff]
      %v1007 = vld [vmem:[#allocation3 + $0x40] sm:$0xff]
      %v1008 = vld [vmem:[#allocation3 + $0x48] sm:$0xff]
      %v1009 = vld [vmem:[#allocation3 + $0x50] sm:$0xff]
      %v1010 = vld [vmem:[#allocation3 + $0x58] sm:$0xff]
      %v1011 = vld [vmem:[#allocation3 + $0x60] sm:$0xff]
      %v1012 = vld [vmem:[#allocation3 + $0x68] sm:$0xff]
      %v1013 = vld [vmem:[#allocation3 + $0x70] sm:$0xff]
      %v1014 = vld [vmem:[#allocation3 + $0x78] sm:$0xff]
      %v1015 = vperm.slane %v193, 0
      %v1017 = vsel %vm200, %v1000, 0
      %v1020 = vsel %vm200, %v1002, 0
      %v1023 = vsel %vm200, %v1004, 0
      %v1026 = vsel %vm200, %v1006, 0
      %v1029 = vsel %vm200, %v1008, 0
      %v1032 = vsel %vm200, %v1010, 0
      %v1035 = vsel %vm200, %v1012, 0
      %v1038 = vsel %vm200, %v1014, 0
      %1040 = vmatpush.msra.mxu0 %v187
      %1041 = vmatpush.msra.mxu0 %v186
      %1042 = vmatpush.msra.mxu0 %v185
      %1043 = vmatpush.msra.mxu0 %v184
      %1044 = vmatpush.msra.mxu0 %v183
      %1045 = vmatpush.msra.mxu0 %v182
      %1046 = vmatpush.msra.mxu0 %v181
      %1047 = vmatpush.msra.mxu0 %v180
      %1048 = vmatpush.msra.mxu0 %v179
      %1049 = vmatpush.msra.mxu0 %v178
      %1050 = vmatpush.msra.mxu0 %v177
      %1051 = vmatpush.msra.mxu0 %v176
      %1052 = vmatpush.msra.mxu0 %v175
      %1053 = vmatpush.msra.mxu0 %v174
      %1054 = vmatpush.msra.mxu0 %v173
      %1055 = vmatpush.msra.mxu0 %v172
      %1056 = vmatmul.f32.gmra.mxu0 %v999
      %v1057 = vpop.f32.mrf.mxu0
      %v1058 = vadd.f32 %v1015, %v1057
      %1059 = vmatmul.f32.gmra.mxu0 %v1001
      %v1060 = vpop.f32.mrf.mxu0
      %v1061 = vadd.f32 %v1015, %v1060
      %1062 = vmatmul.f32.gmra.mxu0 %v1003
      %v1063 = vpop.f32.mrf.mxu0
      %v1064 = vadd.f32 %v1015, %v1063
      %1065 = vmatmul.f32.gmra.mxu0 %v1005
      %v1066 = vpop.f32.mrf.mxu0
      %v1067 = vadd.f32 %v1015, %v1066
      %1068 = vmatmul.f32.gmra.mxu0 %v1007
      %v1069 = vpop.f32.mrf.mxu0
      %v1070 = vadd.f32 %v1015, %v1069
      %1071 = vmatmul.f32.gmra.mxu0 %v1009
      %v1072 = vpop.f32.mrf.mxu0
      %v1073 = vadd.f32 %v1015, %v1072
      %1074 = vmatmul.f32.gmra.mxu0 %v1011
      %v1075 = vpop.f32.mrf.mxu0
      %v1076 = vadd.f32 %v1015, %v1075
      %1077 = vmatmul.f32.gmra.mxu0 %v1013
      %v1078 = vpop.f32.mrf.mxu0
      %v1079 = vadd.f32 %v1015, %v1078
      %1080 = vdwg.mxu0
      %1081 = vmatpush.msra.mxu0 0.0
      %1082 = vmatpush.msra.mxu0 0.0
      %1083 = vmatpush.msra.mxu0 0.0
      %1084 = vmatpush.msra.mxu0 0.0
      %1085 = vmatpush.msra.mxu0 0.0
      %1086 = vmatpush.msra.mxu0 0.0
      %1087 = vmatpush.msra.mxu0 0.0
      %1088 = vmatpush.msra.mxu0 0.0
      %1089 = vmatpush.msra.mxu0 0.0
      %1090 = vmatpush.msra.mxu0 0.0
      %1091 = vmatpush.msra.mxu0 0.0
      %1092 = vmatpush.msra.mxu0 0.0
      %1093 = vmatpush.msra.mxu0 0.0
      %1094 = vmatpush.msra.mxu0 0.0
      %1095 = vmatpush.msra.mxu0 %v189
      %1096 = vmatpush.msra.mxu0 %v188
      %1097 = vmatmul.f32.gmra.mxu0 %v1017
      %v1098 = vpop.f32.mrf.mxu0
      %v1099 = vadd.f32 %v1058, %v1098
      %1100 = vmatmul.f32.gmra.mxu0 %v1020
      %v1101 = vpop.f32.mrf.mxu0
      %v1102 = vadd.f32 %v1061, %v1101
      %1103 = vmatmul.f32.gmra.mxu0 %v1023
      %v1104 = vpop.f32.mrf.mxu0
      %v1105 = vadd.f32 %v1064, %v1104
      %1106 = vmatmul.f32.gmra.mxu0 %v1026
      %v1107 = vpop.f32.mrf.mxu0
      %v1108 = vadd.f32 %v1067, %v1107
      %1109 = vmatmul.f32.gmra.mxu0 %v1029
      %v1110 = vpop.f32.mrf.mxu0
      %v1111 = vadd.f32 %v1070, %v1110
      %1112 = vmatmul.f32.gmra.mxu0 %v1032
      %v1113 = vpop.f32.mrf.mxu0
      %v1114 = vadd.f32 %v1073, %v1113
      %1115 = vmatmul.f32.gmra.mxu0 %v1035
      %v1116 = vpop.f32.mrf.mxu0
      %v1117 = vadd.f32 %v1076, %v1116
      %1118 = vmatmul.f32.gmra.mxu0 %v1038
      %v1119 = vpop.f32.mrf.mxu0
      %v1120 = vadd.f32 %v1079, %v1119
      %1121 = vdwg.mxu0
      %v1122 = vmax.f32 %v1099, 0.0
      %v1123 = vmax.f32 %v1102, 0.0
      %v1124 = vmax.f32 %v1105, 0.0
      %v1125 = vmax.f32 %v1108, 0.0
      %v1126 = vmax.f32 %v1111, 0.0
      %v1127 = vmax.f32 %v1114, 0.0
      %v1128 = vmax.f32 %v1117, 0.0
      %v1129 = vmax.f32 %v1120, 0.0
      %v1130 = vsel %vm200, %v1122, 0.0
      %v1131 = vsel %vm200, %v1123, 0.0
      %v1132 = vadd.f32 %v1130, %v1131
      %v1133 = vsel %vm200, %v1124, 0.0
      %v1134 = vadd.f32 %v1132, %v1133
      %v1135 = vsel %vm200, %v1125, 0.0
      %v1136 = vadd.f32 %v1134, %v1135
      %v1137 = vsel %vm200, %v1126, 0.0
      %v1138 = vadd.f32 %v1136, %v1137
      %v1139 = vsel %vm200, %v1127, 0.0
      %v1140 = vadd.f32 %v1138, %v1139
      %v1141 = vsel %vm200, %v1128, 0.0
      %v1142 = vadd.f32 %v1140, %v1141
      %v1143 = vsel %vm200, %v1129, 0.0
      %v1144 = vadd.f32 %v1142, %v1143
      %v1145 = vrot.slane %v1144, 4
      %v1146 = vadd.f32 %v1144, %v1145
      %v1147 = vrot.slane %v1146, 2
      %v1148 = vadd.f32 %v1146, %v1147
      %v1149 = vrot.slane %v1148, 1
      %v1150 = vadd.f32 %v1148, %v1149
      %v1151 = vrcp.pop 64.0
      %v1152 = vmul.f32 64.0, %v1151
      %v1153 = vsub.f32 1.0, %v1152
      %v1154 = vmul.f32 %v1151, %v1153
      %v1155 = vadd.f32 %v1151, %v1154
      %vm1156 = vweird.f32 %v1151
      %v1157 = vsel %vm1156, %v1151, %v1155
      %v1158 = vmul.f32 %v1150, %v1157
      %v1160 = vsel %vm200, %v1158, 0
      %1162 = vmatpush.msra.mxu0 0.0
      %1163 = vmatpush.msra.mxu0 0.0
      %1164 = vmatpush.msra.mxu0 0.0
      %1165 = vmatpush.msra.mxu0 0.0
      %1166 = vmatpush.msra.mxu0 0.0
      %1167 = vmatpush.msra.mxu0 0.0
      %1168 = vmatpush.msra.mxu0 0.0
      %1169 = vmatpush.msra.mxu0 0.0
      %1170 = vmatpush.msra.mxu0 0.0
      %1171 = vmatpush.msra.mxu0 0.0
      %1172 = vmatpush.msra.mxu0 0.0
      %1173 = vmatpush.msra.mxu0 0.0
      %1174 = vmatpush.msra.mxu0 0.0
      %1175 = vmatpush.msra.mxu0 0.0
      %1176 = vmatpush.msra.mxu0 %v198
      %1177 = vmatpush.msra.mxu0 %v197
      %1178 = vmatmul.f32.gmra.mxu0 %v1160
      %v1179 = vpop.f32.mrf.mxu0
      %v1180 = vadd.f32 %v195, %v1179
      %1181 = vdwg.mxu0
      %v1182 = vmax.f32 %v1180, 0.0
      %vm1183 = vcmask 15360
      %v1185 = vsel %vm1183, %v1182, 0
      %vm1187 = vcmask 1041408
      %v1189 = vsel %vm1187, %v199, 0
      %1191 = vmatpush.msra.mxu0 0.0
      %1192 = vmatpush.msra.mxu0 0.0
      %1193 = vmatpush.msra.mxu0 0.0
      %1194 = vmatpush.msra.mxu0 0.0
      %1195 = vmatpush.msra.mxu0 0.0
      %1196 = vmatpush.msra.mxu0 0.0
      %1197 = vmatpush.msra.mxu0 0.0
      %1198 = vmatpush.msra.mxu0 0.0
      %1199 = vmatpush.msra.mxu0 0.0
      %1200 = vmatpush.msra.mxu0 0.0
      %1201 = vmatpush.msra.mxu0 0.0
      %1202 = vmatpush.msra.mxu0 0.0
      %1203 = vmatpush.msra.mxu0 0.0
      %1204 = vmatpush.msra.mxu0 0.0
      %1205 = vmatpush.msra.mxu0 0.0
      %1206 = vmatpush.msra.mxu0 %v1189
      %1207 = vmatmul.f32.gmra.mxu0 %v1185
      %v1208 = vpop.f32.mrf.mxu0
      %v1209 = vadd.f32 %v196, %v1208
      %1210 = vdwg.mxu0
      %v1211 = vxor.u32 %v1209, 2147483648
      %v1212 = vmul.f32 %v1211, 1.442695
      %v1213 = vpow.pop %v1212
      %v1214 = vadd.f32 %v1213, 1.0
      %v1215 = vrcp.pop %v1214
      %v1216 = vmul.f32 %v1214, %v1215
      %v1217 = vsub.f32 1.0, %v1216
      %v1218 = vmul.f32 %v1215, %v1217
      %v1219 = vadd.f32 %v1215, %v1218
      %vm1220 = vweird.f32 %v1214
      %vm1221 = vweird.f32 %v1215
      %vm1222 = vmor %vm1220, %vm1221
      %v1223 = vsel %vm1222, %v1215, %v1219
      %v1224 = vand.u32 2147483647, %v1214
      %vm1225 = vcmp.eq.f32.partialorder %v1224, 8.507059e+37
      %v1226 = vand.u32 %v1214, 2147483648
      %v1227 = vor.u32 1.1754944e-38, %v1226
      %v1228 = vsel %vm1225, %v1227, %v1223
      %v1229 = vmul.f32 1.0, %v1228
      %v1230 = vperm.slane %v1229, 0
      %v1231 = vmul.f32 %v1122, %v1230
      %v1232 = vmul.f32 %v1123, %v1230
      %v1233 = vmul.f32 %v1124, %v1230
      %v1234 = vmul.f32 %v1125, %v1230
      %v1235 = vmul.f32 %v1126, %v1230
      %v1236 = vmul.f32 %v1127, %v1230
      %v1237 = vmul.f32 %v1128, %v1230
      %v1238 = vmul.f32 %v1129, %v1230
      %v1239 = vperm.slane %v194, 0
      %v1241 = vsel %vm200, %v1231, 0
      %v1244 = vsel %vm200, %v1232, 0
      %v1247 = vsel %vm200, %v1233, 0
      %v1250 = vsel %vm200, %v1234, 0
      %v1253 = vsel %vm200, %v1235, 0
      %v1256 = vsel %vm200, %v1236, 0
      %v1259 = vsel %vm200, %v1237, 0
      %v1262 = vsel %vm200, %v1238, 0
      %1264 = vmatpush.msra.mxu0 0.0
      %1265 = vmatpush.msra.mxu0 0.0
      %1266 = vmatpush.msra.mxu0 0.0
      %1267 = vmatpush.msra.mxu0 0.0
      %1268 = vmatpush.msra.mxu0 0.0
      %1269 = vmatpush.msra.mxu0 0.0
      %1270 = vmatpush.msra.mxu0 0.0
      %1271 = vmatpush.msra.mxu0 0.0
      %1272 = vmatpush.msra.mxu0 0.0
      %1273 = vmatpush.msra.mxu0 0.0
      %1274 = vmatpush.msra.mxu0 0.0
      %1275 = vmatpush.msra.mxu0 0.0
      %1276 = vmatpush.msra.mxu0 0.0
      %1277 = vmatpush.msra.mxu0 0.0
      %1278 = vmatpush.msra.mxu0 %v191
      %1279 = vmatpush.msra.mxu0 %v190
      %1280 = vmatmul.f32.gmra.mxu0 %v1241
      %v1281 = vpop.f32.mrf.mxu0
      %v1282 = vadd.f32 %v1239, %v1281
      %1283 = vmatmul.f32.gmra.mxu0 %v1244
      %v1284 = vpop.f32.mrf.mxu0
      %v1285 = vadd.f32 %v1239, %v1284
      %1286 = vmatmul.f32.gmra.mxu0 %v1247
      %v1287 = vpop.f32.mrf.mxu0
      %v1288 = vadd.f32 %v1239, %v1287
      %1289 = vmatmul.f32.gmra.mxu0 %v1250
      %v1290 = vpop.f32.mrf.mxu0
      %v1291 = vadd.f32 %v1239, %v1290
      %1292 = vmatmul.f32.gmra.mxu0 %v1253
      %v1293 = vpop.f32.mrf.mxu0
      %v1294 = vadd.f32 %v1239, %v1293
      %1295 = vmatmul.f32.gmra.mxu0 %v1256
      %v1296 = vpop.f32.mrf.mxu0
      %v1297 = vadd.f32 %v1239, %v1296
      %1298 = vmatmul.f32.gmra.mxu0 %v1259
      %v1299 = vpop.f32.mrf.mxu0
      %v1300 = vadd.f32 %v1239, %v1299
      %1301 = vmatmul.f32.gmra.mxu0 %v1262
      %v1302 = vpop.f32.mrf.mxu0
      %v1303 = vadd.f32 %v1239, %v1302
      %1304 = vdwg.mxu0
      %1305 = vst.msk [vmem:[%s170] sm:$0xff] %vm200, %v1282
      %1306 = vst.msk [vmem:[%s170 + $0x8] sm:$0xff] %vm200, %v1285
      %1307 = vst.msk [vmem:[%s170 + $0x10] sm:$0xff] %vm200, %v1288
      %1308 = vst.msk [vmem:[%s170 + $0x18] sm:$0xff] %vm200, %v1291
      %1309 = vst.msk [vmem:[%s170 + $0x20] sm:$0xff] %vm200, %v1294
      %1310 = vst.msk [vmem:[%s170 + $0x28] sm:$0xff] %vm200, %v1297
      %1311 = vst.msk [vmem:[%s170 + $0x30] sm:$0xff] %vm200, %v1300
      %1312 = vst.msk [vmem:[%s170 + $0x38] sm:$0xff] %vm200, %v1303
      %p1313 = scmp.lt.s32.totalorder %s14, 3
      %s1314 = scalar_select %p1313, %s14, 3
      %s1315 = smul.addr %s1314, 8
      %s1316 = smul.addr %s1315, 8
      %s1317 = scalar_lea.vmem %s3, %s1316
      // Predicated region
      $region33: #{tpu_custom_call.1} parent=31 // pred_check
        %p1318 = pneg %p100
      $region34: #{tpu_custom_call.1} parent=31 // pred_check_branch
        %1320 = sbr.rel (%p1318) target = $region36
      $region35: #{tpu_custom_call.1} parent=31 // pred_region
        _
      $region36: #{tpu_custom_call.1} parent=31 // pred_fallthru
        _
    $region32: #{tpu_custom_call.1} parent=5 // pred_fallthru
      _
    %p1321 = scmp.le.s32.totalorder 2, %s9
    // Predicated region
    $region37: #{tpu_custom_call.1} parent=5 // pred_check
      %p1322 = pneg %p1321
    $region38: #{tpu_custom_call.1} parent=5 // pred_check_branch
      %1324 = sbr.rel (%p1322) target = $region40
    $region39: #{tpu_custom_call.1} parent=5 // pred_region
      %s1325 = ssub.s32 %s9, 2
      // Predicated region
      $region41: #{tpu_custom_call.1} parent=39 // pred_check
        %p1326 = pneg %p106
      $region42: #{tpu_custom_call.1} parent=39 // pred_check_branch
        %1328 = sbr.rel (%p1326) target = $region44
      $region43: #{tpu_custom_call.1} parent=39 // pred_region
        %p1329 = scmp.lt.s32.totalorder %s15, 3
        %s1330 = scalar_select %p1329, %s15, 3
        %s1331 = smul.addr %s1330, 8
        %s1332 = smul.addr %s1331, 8
        %s1333 = scalar_lea.vmem %s3, %s1332
      $region44: #{tpu_custom_call.1} parent=39 // pred_fallthru
        _
    $region40: #{tpu_custom_call.1} parent=5 // pred_fallthru
      _
  $region6: #{tpu_custom_call.1} parent=0 // loop_footer
    %s13 = sadd.s32 1, %s9
  $region7: #{tpu_custom_call.1} parent=0 // loop_footer_branch
    %8 = sbr.rel target = $region3
  $region8: #{tpu_custom_call.1} parent=0 // loop_exit
    _

</llo_original>
